<compile_context>
chip_gen: v7x
topology: tpu7x:2x2x1
jax: 0.10.0
libtpu: 0.0.40
codegen_flags: <defaults>
</compile_context>

<pallas_src>
import math

import jax
import jax.numpy as jnp
from jax import lax
from jax.experimental import pallas as pl
from jax.experimental.pallas import tpu as pltpu


def _sigmoid(v):
    return 1.0 / (1.0 + jnp.exp(-v))


# ----------------------------------------------------------------------------
# Generic row+col tiled matmul-with-bias kernel (used for the hoisted input
# GEMM and the vocab projection).  Weights resident per column tile.
# ----------------------------------------------------------------------------
def _matmul_bias_kernel(x_ref, w_ref, b_ref, o_ref):
    acc = jnp.dot(x_ref[...], w_ref[...], preferred_element_type=jnp.float32)
    o_ref[...] = (acc + b_ref[...]).astype(o_ref.dtype)


def _matmul(x, w, bias=None, *, out_dtype=jnp.float32, max_tm=256, max_tn=1024):
    """x: (M, K); w: (K, N); bias: (N,) or None.  Returns (M, N) in out_dtype.

    Pads N to a multiple of 128 (lane-dense stores) and M to a multiple of the
    row tile; padding is sliced off before returning.
    """
    M, K = x.shape
    _, N = w.shape

    Np = pl.cdiv(N, 128) * 128
    if Np != N:
        w = jnp.pad(w, ((0, 0), (0, Np - N)))
    if bias is None:
        b = jnp.zeros((1, Np), jnp.float32)
    else:
        b = bias.reshape(1, -1).astype(jnp.float32)
        if Np != N:
            b = jnp.pad(b, ((0, 0), (0, Np - N)))

    # Column tile: multiple of 128 that divides Np (<= max_tn).
    tn = min(max_tn, Np)
    while Np % tn:
        tn -= 128
    # Row tile: multiple of 8, capped (v7x 64 MiB VMEM friendly).
    tm = min(max_tm, pl.cdiv(M, 8) * 8)
    Mp = pl.cdiv(M, tm) * tm
    if Mp != M:
        x = jnp.pad(x, ((0, Mp - M), (0, 0)))

    cost = pl.CostEstimate(
        flops=int(2 * Mp * K * Np),
        transcendentals=0,
        bytes_accessed=int(Mp * K * x.dtype.itemsize
                           + K * Np * w.dtype.itemsize
                           + Mp * Np * jnp.dtype(out_dtype).itemsize),
    )

    out = pl.pallas_call(
        _matmul_bias_kernel,
        out_shape=jax.ShapeDtypeStruct((Mp, Np), out_dtype),
        grid_spec=pltpu.PrefetchScalarGridSpec(
            num_scalar_prefetch=0,
            grid=(Mp // tm, Np // tn),
            in_specs=[
                pl.BlockSpec((tm, K), lambda i, j: (i, 0)),   # activation tile
                pl.BlockSpec((K, tn), lambda i, j: (0, j)),   # weight col tile
                pl.BlockSpec((1, tn), lambda i, j: (0, j)),   # bias col tile
            ],
            out_specs=pl.BlockSpec((tm, tn), lambda i, j: (i, j)),
        ),
        compiler_params=pltpu.CompilerParams(
            dimension_semantics=("parallel", "parallel")),
        cost_estimate=cost,
    )(x, w, b)

    if Mp != M or Np != N:
        out = out[:M, :N]
    return out


# ----------------------------------------------------------------------------
# GRU layer kernel: time-chunked grid, in-kernel fori_loop over the chunk,
# recurrent state in an f32 VMEM scratch, W_hh resident, only h @ W_hh on the
# serial critical path (input gates arrive precomputed as gi_seq).
# ----------------------------------------------------------------------------
def _gru_layer_kernel(gi_ref, w_hh_ref, b_in_ref, b_hh_ref, h0_ref,
                      y_ref, hT_ref, h_scr):
    nh = h_scr.shape[-1]
    tc = gi_ref.shape[0]

    @pl.when(pl.program_id(0) == 0)
    def _():
        h_scr[...] = h0_ref[...]

    w_hh = w_hh_ref[...]                      # resident (H, 3H), bf16 or f32
    b_in = b_in_ref[...]                      # (B, 3H) f32 (ctx + b_ih folded)
    b_hh = b_hh_ref[...]                      # (1, 3H) f32

    def step(t, h):
        gi = gi_ref[t] + b_in                 # (B, 3H) f32 (precomputed x@W_ih)
        gh = jnp.dot(h.astype(w_hh.dtype), w_hh,
                     preferred_element_type=jnp.float32) + b_hh
        r = _sigmoid(gi[:, :nh] + gh[:, :nh])
        z = _sigmoid(gi[:, nh:2 * nh] + gh[:, nh:2 * nh])
        n = jnp.tanh(gi[:, 2 * nh:] + r * gh[:, 2 * nh:])
        h_new = (1.0 - z) * n + z * h
        y_ref[t] = h_new.astype(y_ref.dtype)  # stays in VMEM; DMA'd per chunk
        return h_new

    h = lax.fori_loop(0, tc, step, h_scr[...], unroll=True)
    h_scr[...] = h                            # carry across grid steps

    @pl.when(pl.program_id(0) == pl.num_programs(0) - 1)
    def _():
        hT_ref[...] = h                       # final state, written once


def _pick_chunk(T, cap=16):
    for c in range(min(T, cap), 0, -1):
        if T % c == 0:
            return c
    return 1


def _gru_layer(gi_seq, w_hh, b_in, b_hh, h0, *, y_dtype):
    """gi_seq: (T, B, 3H) f32 precomputed input gates (without b_in);
    w_hh: (H, 3H); b_in: (B, 3H) f32; b_hh: (1, 3H) f32; h0: (B, H) f32.
    Returns (y: (T, B, H) y_dtype, h_T: (B, H) f32)."""
    T, B, G = gi_seq.shape
    H = w_hh.shape[0]
    tc = _pick_chunk(T)

    cost = pl.CostEstimate(
        flops=int(T * (2 * B * H * G + 12 * B * H)),
        transcendentals=int(3 * T * B * H),
        bytes_accessed=int(gi_seq.size * gi_seq.dtype.itemsize
                           + T * B * H * jnp.dtype(y_dtype).itemsize
                           + w_hh.size * w_hh.dtype.itemsize
                           + (b_in.size + b_hh.size + 2 * B * H) * 4),
    )

    return pl.pallas_call(
        _gru_layer_kernel,
        out_shape=(jax.ShapeDtypeStruct((T, B, H), y_dtype),
                   jax.ShapeDtypeStruct((B, H), jnp.float32)),
        grid_spec=pltpu.PrefetchScalarGridSpec(
            num_scalar_prefetch=0,
            grid=(T // tc,),
            in_specs=[
                pl.BlockSpec((tc, B, G), lambda t: (t, 0, 0)),  # gi chunk
                pl.BlockSpec((H, G), lambda t: (0, 0)),         # W_hh resident
                pl.BlockSpec((B, G), lambda t: (0, 0)),         # input bias
                pl.BlockSpec((1, G), lambda t: (0, 0)),         # hidden bias
                pl.BlockSpec((B, H), lambda t: (0, 0)),         # h0 resident
            ],
            out_specs=[
                pl.BlockSpec((tc, B, H), lambda t: (t, 0, 0)),  # y chunk
                pl.BlockSpec((B, H), lambda t: (0, 0)),         # h_T resident
            ],
            scratch_shapes=[pltpu.VMEM((B, H), jnp.float32)],
        ),
        compiler_params=pltpu.CompilerParams(
            dimension_semantics=("arbitrary",)),   # true recurrence over time
        cost_estimate=cost,
    )(gi_seq, w_hh, b_in, b_hh, h0)


# ----------------------------------------------------------------------------
# Full decoder forward (matches Seq2SeqDecoder.forward semantics).
# ----------------------------------------------------------------------------
@jax.jit
def seq2seq_decoder_forward(params, X, state):
    """X: (B, T) int32 token ids; state: (L, B, H) f32.
    Returns (output: (B, T, V) f32, new_state: (L, B, H) f32)."""
    emb_tbl = params["embedding"]                       # (V, E)
    E = emb_tbl.shape[1]

    emb = jnp.take(emb_tbl, X, axis=0)                  # (B, T, E)  [XLA gather]
    x_seq = jnp.transpose(emb, (1, 0, 2))               # (T, B, E)
    T, B, _ = x_seq.shape
    ctx = state[-1].astype(jnp.float32)                 # (B, H), const over time

    layer_in = x_seq
    new_states = []
    for l, lp in enumerate(params["gru"]):
        w_ih = lp["w_ih"]
        cdt = w_ih.dtype                                # compute dtype (bf16/f32)
        H = lp["w_hh"].shape[0]
        if l == 0:
            # [emb_t, ctx] @ W_ih = emb_t @ W_ih[:E] + ctx @ W_ih[E:]
            # The ctx part is constant over time -> folded into the input bias.
            w_x = w_ih[:E]                                          # (E, 3H)
            b_in = (jnp.dot(ctx, w_ih[E:].astype(jnp.float32),
                            preferred_element_type=jnp.float32)
                    + lp["b_ih"]).astype(jnp.float32)               # (B, 3H)
        else:
            w_x = w_ih                                              # (H, 3H)
            b_in = jnp.broadcast_to(lp["b_ih"],
                                    (B, lp["b_ih"].shape[-1])
                                    ).astype(jnp.float32)           # (B, 3H)

        # Hoisted, non-recurrent input GEMM as one big tiled matmul.
        I = layer_in.shape[-1]
        gi_seq = _matmul(layer_in.reshape(T * B, I).astype(cdt), w_x,
                         out_dtype=jnp.float32).reshape(T, B, -1)

        y, h_last = _gru_layer(gi_seq, lp["w_hh"], b_in,
                               lp["b_hh"].reshape(1, -1).astype(jnp.float32),
                               state[l].astype(jnp.float32),
                               y_dtype=cdt)
        new_states.append(h_last)
        layer_in = y                                                # (T, B, H)

    new_state = jnp.stack(new_states, axis=0)                       # (L, B, H)

    # Vocab projection: row+col tiled matmul, V padded to 128 inside _matmul.
    w_out, b_out = params["w_out"], params["b_out"]
    H, V = w_out.shape
    logits = _matmul(layer_in.reshape(T * B, H).astype(w_out.dtype),
                     w_out, bias=b_out,
                     out_dtype=jnp.float32).reshape(T, B, V)
    return jnp.transpose(logits, (1, 0, 2)), new_state              # (B, T, V)


# ----------------------------------------------------------------------------
# Parameters (weights stored pre-transposed and in bf16 by default; biases f32)
# and a pure-JAX f32 reference.
# ----------------------------------------------------------------------------
def init_decoder_params(key, vocab_size, embed_size, num_hiddens, num_layers,
                        dtype=jnp.bfloat16):
    keys = jax.random.split(key, 3 + 4 * num_layers)
    emb = jax.random.normal(keys[0], (vocab_size, embed_size),
                            jnp.float32).astype(dtype)
    k = 1.0 / math.sqrt(num_hiddens)
    gru, ki = [], 1
    for l in range(num_layers):
        in_size = embed_size + num_hiddens if l == 0 else num_hiddens
        w_ih = jax.random.uniform(keys[ki], (in_size, 3 * num_hiddens),
                                  jnp.float32, -k, k).astype(dtype); ki += 1
        w_hh = jax.random.uniform(keys[ki], (num_hiddens, 3 * num_hiddens),
                                  jnp.float32, -k, k).astype(dtype); ki += 1
        b_ih = jax.random.uniform(keys[ki], (3 * num_hiddens,),
                                  jnp.float32, -k, k); ki += 1
        b_hh = jax.random.uniform(keys[ki], (3 * num_hiddens,),
                                  jnp.float32, -k, k); ki += 1
        gru.append(dict(w_ih=w_ih, w_hh=w_hh, b_ih=b_ih, b_hh=b_hh))
    kd = 1.0 / math.sqrt(num_hiddens)
    w_out = jax.random.uniform(keys[ki], (num_hiddens, vocab_size),
                               jnp.float32, -kd, kd).astype(dtype); ki += 1
    b_out = jax.random.uniform(keys[ki], (vocab_size,), jnp.float32, -kd, kd)
    return dict(embedding=emb, gru=gru, w_out=w_out, b_out=b_out)


def _reference_forward(params, X, state):
    """Straightforward f32 JAX port of the PyTorch forward (concat + GRU math)."""
    emb = jnp.take(params["embedding"], X, axis=0)        # (B, T, E)
    x = jnp.transpose(emb, (1, 0, 2))                     # (T, B, E)
    T = x.shape[0]
    ctx = jnp.broadcast_to(state[-1], (T,) + state[-1].shape)
    layer_in = jnp.concatenate([x, ctx], axis=2)          # (T, B, E+H)
    new_states = []
    for l, lp in enumerate(params["gru"]):
        h = state[l]
        H = h.shape[-1]
        ys = []
        for t in range(T):
            gi = layer_in[t] @ lp["w_ih"] + lp["b_ih"]
            gh = h @ lp["w_hh"] + lp["b_hh"]
            r = _sigmoid(gi[:, :H] + gh[:, :H])
            z = _sigmoid(gi[:, H:2 * H] + gh[:, H:2 * H])
            n = jnp.tanh(gi[:, 2 * H:] + r * gh[:, 2 * H:])
            h = (1.0 - z) * n + z * h
            ys.append(h)
        layer_in = jnp.stack(ys)                          # (T, B, H)
        new_states.append(h)
    out = layer_in @ params["w_out"] + params["b_out"]    # (T, B, V)
    return jnp.transpose(out, (1, 0, 2)), jnp.stack(new_states)


if __name__ == "__main__":
    vocab_size, embed_size, num_hiddens, num_layers = 32, 16, 32, 2
    batch, num_steps = 4, 20

    key = jax.random.PRNGKey(0)
    kp, kx, ks = jax.random.split(key, 3)
    params_bf16 = init_decoder_params(kp, vocab_size, embed_size, num_hiddens,
                                      num_layers, dtype=jnp.bfloat16)
    params_f32 = jax.tree_util.tree_map(lambda a: a.astype(jnp.float32),
                                        params_bf16)

    X = jax.random.randint(kx, (batch, num_steps), 0, vocab_size,
                           dtype=jnp.int32)
    # init_state(enc_outputs) just returns the encoder's final hidden state.
    state = jax.random.normal(ks, (num_layers, batch, num_hiddens),
                              jnp.float32)

    ref_out, ref_state = _reference_forward(params_f32, X, state)

    # f32-weight path: tight structural check of the kernels.
    out32, st32 = seq2seq_decoder_forward(params_f32, X, state)
    jax.block_until_ready((out32, st32))
    assert out32.shape == (batch, num_steps, vocab_size)
    assert st32.shape == (num_layers, batch, num_hiddens)
    assert jnp.allclose(out32, ref_out, atol=2e-3, rtol=2e-3), \
        float(jnp.max(jnp.abs(out32 - ref_out)))
    assert jnp.allclose(st32, ref_state, atol=2e-3, rtol=2e-3), \
        float(jnp.max(jnp.abs(st32 - ref_state)))

    # bf16-weight path (MXU-native): f32 accumulation, looser tolerance for
    # bf16 activation rounding in the recurrence.
    out16, st16 = seq2seq_decoder_forward(params_bf16, X, state)
    jax.block_until_ready((out16, st16))
    assert jnp.allclose(out16, ref_out, atol=3e-2, rtol=3e-2), \
        float(jnp.max(jnp.abs(out16 - ref_out)))
    assert jnp.allclose(st16, ref_state, atol=3e-2, rtol=3e-2), \
        float(jnp.max(jnp.abs(st16 - ref_state)))

    print("KERNEL_OK")
</pallas_src>

<mosaic_0001>
module attributes {stable_mosaic.version = 11 : i64} {
  func.func @_matmul_bias_kernel(%arg0: i32, %arg1: i32, %arg2: memref<80x16xf32, #tpu.memory_space<vmem>>, %arg3: memref<16x128xf32, #tpu.memory_space<vmem>>, %arg4: memref<1x128xf32, #tpu.memory_space<vmem>>, %arg5: memref<80x128xf32, #tpu.memory_space<vmem>>) attributes {dimension_semantics = [#tpu.dimension_semantics<parallel>, #tpu.dimension_semantics<parallel>], iteration_bounds = array<i64: 1, 1>, scalar_prefetch = 0 : i64, scratch_operands = 0 : i64, tpu.core_type = #tpu.core_type<tc>, window_params = [{transform_indices = @transform_0, window_bounds = array<i64: 80, 16>}, {transform_indices = @transform_1, window_bounds = array<i64: 16, 128>}, {transform_indices = @transform_2, window_bounds = array<i64: 1, 128>}, {transform_indices = @transform_3, window_bounds = array<i64: 80, 128>}]} {
    %c0 = arith.constant 0 : index
    %c0_0 = arith.constant 0 : index
    %0 = vector.load %arg2[%c0, %c0_0] : memref<80x16xf32, #tpu.memory_space<vmem>>, vector<80x16xf32>
    %c0_1 = arith.constant 0 : index
    %c0_2 = arith.constant 0 : index
    %1 = vector.load %arg3[%c0_1, %c0_2] : memref<16x128xf32, #tpu.memory_space<vmem>>, vector<16x128xf32>
    %cst = arith.constant dense<0.000000e+00> : vector<80x128xf32>
    %2 = tpu.matmul %0, %1, %cst {dimension_numbers = #tpu.dot_dimension_numbers<[1], [0], [0], [1], [0, 0, 1, 1], [], []>} : vector<80x16xf32>, vector<16x128xf32>, vector<80x128xf32> -> vector<80x128xf32>
    %c0_3 = arith.constant 0 : index
    %c0_4 = arith.constant 0 : index
    %3 = vector.load %arg4[%c0_3, %c0_4] : memref<1x128xf32, #tpu.memory_space<vmem>>, vector<1x128xf32>
    %4 = vector.broadcast %3 : vector<1x128xf32> to vector<80x128xf32>
    %5 = arith.addf %2, %4 : vector<80x128xf32>
    %c0_5 = arith.constant 0 : index
    %c0_6 = arith.constant 0 : index
    %6 = vector.load %arg5[%c0_5, %c0_6] : memref<80x128xf32, #tpu.memory_space<vmem>>, vector<80x128xf32>
    tpu.vector_store %arg5[%c0_5, %c0_6], %5 {strides = array<i32>} : memref<80x128xf32, #tpu.memory_space<vmem>>, vector<80x128xf32>,
    return
  }
  func.func @transform_0(%arg0: i32, %arg1: i32) -> (i32, i32) {
    %c0_i32 = arith.constant 0 : i32
    %c0_i32_0 = arith.constant 0 : i32
    return %arg0, %c0_i32 : i32, i32
  }
  func.func @transform_1(%arg0: i32, %arg1: i32) -> (i32, i32) {
    %c0_i32 = arith.constant 0 : i32
    %c0_i32_0 = arith.constant 0 : i32
    return %c0_i32, %arg1 : i32, i32
  }
  func.func @transform_2(%arg0: i32, %arg1: i32) -> (i32, i32) {
    %c0_i32 = arith.constant 0 : i32
    %c0_i32_0 = arith.constant 0 : i32
    return %c0_i32, %arg1 : i32, i32
  }
  func.func @transform_3(%arg0: i32, %arg1: i32) -> (i32, i32) {
    %c0_i32 = arith.constant 0 : i32
    return %arg0, %arg1 : i32, i32
  }
}

module attributes {stable_mosaic.version = 11 : i64} {
  func.func @_gru_layer_kernel(%arg0: i32, %arg1: memref<10x4x96xf32, #tpu.memory_space<vmem>>, %arg2: memref<32x96xf32, #tpu.memory_space<vmem>>, %arg3: memref<4x96xf32, #tpu.memory_space<vmem>>, %arg4: memref<1x96xf32, #tpu.memory_space<vmem>>, %arg5: memref<4x32xf32, #tpu.memory_space<vmem>>, %arg6: memref<10x4x32xf32, #tpu.memory_space<vmem>>, %arg7: memref<4x32xf32, #tpu.memory_space<vmem>>, %arg8: memref<4x32xf32, #tpu.memory_space<vmem>>) attributes {dimension_semantics = [#tpu.dimension_semantics<arbitrary>], iteration_bounds = array<i64: 2>, scalar_prefetch = 0 : i64, scratch_operands = 1 : i64, tpu.core_type = #tpu.core_type<tc>, window_params = [{transform_indices = @transform_0, window_bounds = array<i64: 10, 4, 96>}, {pipeline_mode = #tpu.pipeline_mode<synchronous>, transform_indices = @transform_1, window_bounds = array<i64: 32, 96>}, {pipeline_mode = #tpu.pipeline_mode<synchronous>, transform_indices = @transform_2, window_bounds = array<i64: 4, 96>}, {pipeline_mode = #tpu.pipeline_mode<synchronous>, transform_indices = @transform_3, window_bounds = array<i64: 1, 96>}, {pipeline_mode = #tpu.pipeline_mode<synchronous>, transform_indices = @transform_4, window_bounds = array<i64: 4, 32>}, {transform_indices = @transform_5, window_bounds = array<i64: 10, 4, 32>}, {pipeline_mode = #tpu.pipeline_mode<synchronous>, transform_indices = @transform_6, window_bounds = array<i64: 4, 32>}]} {
    %c0_i32 = arith.constant 0 : i32
    %0 = arith.cmpi eq, %arg0, %c0_i32 : i32
    %1 = arith.extui %0 : i1 to i32
    %c0_i32_0 = arith.constant 0 : i32
    %2 = arith.cmpi ne, %1, %c0_i32_0 : i32
    scf.if %2 {
      %c0_132 = arith.constant 0 : index
      %c0_133 = arith.constant 0 : index
      %421 = vector.load %arg5[%c0_132, %c0_133] : memref<4x32xf32, #tpu.memory_space<vmem>>, vector<4x32xf32>
      %c0_134 = arith.constant 0 : index
      %c0_135 = arith.constant 0 : index
      %422 = vector.load %arg8[%c0_134, %c0_135] : memref<4x32xf32, #tpu.memory_space<vmem>>, vector<4x32xf32>
      tpu.vector_store %arg8[%c0_134, %c0_135], %421 {strides = array<i32>} : memref<4x32xf32, #tpu.memory_space<vmem>>, vector<4x32xf32>,
    } else {
    }
    %c0 = arith.constant 0 : index
    %c0_1 = arith.constant 0 : index
    %3 = vector.load %arg2[%c0, %c0_1] : memref<32x96xf32, #tpu.memory_space<vmem>>, vector<32x96xf32>
    %c0_2 = arith.constant 0 : index
    %c0_3 = arith.constant 0 : index
    %4 = vector.load %arg3[%c0_2, %c0_3] : memref<4x96xf32, #tpu.memory_space<vmem>>, vector<4x96xf32>
    %c0_4 = arith.constant 0 : index
    %c0_5 = arith.constant 0 : index
    %5 = vector.load %arg4[%c0_4, %c0_5] : memref<1x96xf32, #tpu.memory_space<vmem>>, vector<1x96xf32>
    %c0_6 = arith.constant 0 : index
    %c0_7 = arith.constant 0 : index
    %6 = vector.load %arg8[%c0_6, %c0_7] : memref<4x32xf32, #tpu.memory_space<vmem>>, vector<4x32xf32>
    %c0_i32_8 = arith.constant 0 : i32
    %7 = arith.index_cast %c0_i32_8 : i32 to index
    %c0_9 = arith.constant 0 : index
    %c0_10 = arith.constant 0 : index
    %8 = vector.load %arg1[%7, %c0_9, %c0_10] : memref<10x4x96xf32, #tpu.memory_space<vmem>>, vector<1x4x96xf32>
    %9 = vector.shape_cast %8 : vector<1x4x96xf32> to vector<4x96xf32>
    %10 = arith.addf %9, %4 : vector<4x96xf32>
    %cst = arith.constant dense<0.000000e+00> : vector<4x96xf32>
    %11 = tpu.matmul %6, %3, %cst {dimension_numbers = #tpu.dot_dimension_numbers<[1], [0], [0], [1], [0, 0, 1, 1], [], []>} : vector<4x32xf32>, vector<32x96xf32>, vector<4x96xf32> -> vector<4x96xf32>
    %12 = vector.broadcast %5 : vector<1x96xf32> to vector<4x96xf32>
    %13 = arith.addf %11, %12 : vector<4x96xf32>
    %14 = vector.extract_strided_slice %10 {offsets = [0, 0], sizes = [4, 32], strides = [1, 1]} : vector<4x96xf32> to vector<4x32xf32>
    %15 = vector.extract_strided_slice %13 {offsets = [0, 0], sizes = [4, 32], strides = [1, 1]} : vector<4x96xf32> to vector<4x32xf32>
    %16 = arith.addf %14, %15 : vector<4x32xf32>
    %cst_11 = arith.constant 0.000000e+00 : f32
    %17 = vector.broadcast %cst_11 : f32 to vector<4x32xf32>
    %18 = arith.subf %17, %16 : vector<4x32xf32>
    %19 = math.exp %18 : vector<4x32xf32>
    %cst_12 = arith.constant 1.000000e+00 : f32
    %20 = vector.broadcast %cst_12 : f32 to vector<4x32xf32>
    %21 = arith.addf %20, %19 : vector<4x32xf32>
    %cst_13 = arith.constant 1.000000e+00 : f32
    %22 = vector.broadcast %cst_13 : f32 to vector<4x32xf32>
    %23 = arith.divf %22, %21 : vector<4x32xf32>
    %24 = vector.extract_strided_slice %10 {offsets = [0, 32], sizes = [4, 32], strides = [1, 1]} : vector<4x96xf32> to vector<4x32xf32>
    %25 = vector.extract_strided_slice %13 {offsets = [0, 32], sizes = [4, 32], strides = [1, 1]} : vector<4x96xf32> to vector<4x32xf32>
    %26 = arith.addf %24, %25 : vector<4x32xf32>
    %cst_14 = arith.constant 0.000000e+00 : f32
    %27 = vector.broadcast %cst_14 : f32 to vector<4x32xf32>
    %28 = arith.subf %27, %26 : vector<4x32xf32>
    %29 = math.exp %28 : vector<4x32xf32>
    %cst_15 = arith.constant 1.000000e+00 : f32
    %30 = vector.broadcast %cst_15 : f32 to vector<4x32xf32>
    %31 = arith.addf %30, %29 : vector<4x32xf32>
    %cst_16 = arith.constant 1.000000e+00 : f32
    %32 = vector.broadcast %cst_16 : f32 to vector<4x32xf32>
    %33 = arith.divf %32, %31 : vector<4x32xf32>
    %34 = vector.extract_strided_slice %10 {offsets = [0, 64], sizes = [4, 32], strides = [1, 1]} : vector<4x96xf32> to vector<4x32xf32>
    %35 = vector.extract_strided_slice %13 {offsets = [0, 64], sizes = [4, 32], strides = [1, 1]} : vector<4x96xf32> to vector<4x32xf32>
    %36 = arith.mulf %23, %35 : vector<4x32xf32>
    %37 = arith.addf %34, %36 : vector<4x32xf32>
    %38 = math.tanh %37 : vector<4x32xf32>
    %cst_17 = arith.constant 1.000000e+00 : f32
    %39 = vector.broadcast %cst_17 : f32 to vector<4x32xf32>
    %40 = arith.subf %39, %33 : vector<4x32xf32>
    %41 = arith.mulf %40, %38 : vector<4x32xf32>
    %42 = arith.mulf %33, %6 : vector<4x32xf32>
    %43 = arith.addf %41, %42 : vector<4x32xf32>
    %44 = arith.index_cast %c0_i32_8 : i32 to index
    %c0_18 = arith.constant 0 : index
    %c0_19 = arith.constant 0 : index
    %45 = vector.load %arg6[%44, %c0_18, %c0_19] : memref<10x4x32xf32, #tpu.memory_space<vmem>>, vector<1x4x32xf32>
    %46 = vector.shape_cast %45 : vector<1x4x32xf32> to vector<4x32xf32>
    %47 = vector.shape_cast %43 : vector<4x32xf32> to vector<1x4x32xf32>
    tpu.vector_store %arg6[%44, %c0_18, %c0_19], %47 {strides = array<i32>} : memref<10x4x32xf32, #tpu.memory_space<vmem>>, vector<1x4x32xf32>,
    %c1_i32 = arith.constant 1 : i32
    %48 = arith.index_cast %c1_i32 : i32 to index
    %c0_20 = arith.constant 0 : index
    %c0_21 = arith.constant 0 : index
    %49 = vector.load %arg1[%48, %c0_20, %c0_21] : memref<10x4x96xf32, #tpu.memory_space<vmem>>, vector<1x4x96xf32>
    %50 = vector.shape_cast %49 : vector<1x4x96xf32> to vector<4x96xf32>
    %51 = arith.addf %50, %4 : vector<4x96xf32>
    %cst_22 = arith.constant dense<0.000000e+00> : vector<4x96xf32>
    %52 = tpu.matmul %43, %3, %cst_22 {dimension_numbers = #tpu.dot_dimension_numbers<[1], [0], [0], [1], [0, 0, 1, 1], [], []>} : vector<4x32xf32>, vector<32x96xf32>, vector<4x96xf32> -> vector<4x96xf32>
    %53 = vector.broadcast %5 : vector<1x96xf32> to vector<4x96xf32>
    %54 = arith.addf %52, %53 : vector<4x96xf32>
    %55 = vector.extract_strided_slice %51 {offsets = [0, 0], sizes = [4, 32], strides = [1, 1]} : vector<4x96xf32> to vector<4x32xf32>
    %56 = vector.extract_strided_slice %54 {offsets = [0, 0], sizes = [4, 32], strides = [1, 1]} : vector<4x96xf32> to vector<4x32xf32>
    %57 = arith.addf %55, %56 : vector<4x32xf32>
    %cst_23 = arith.constant 0.000000e+00 : f32
    %58 = vector.broadcast %cst_23 : f32 to vector<4x32xf32>
    %59 = arith.subf %58, %57 : vector<4x32xf32>
    %60 = math.exp %59 : vector<4x32xf32>
    %cst_24 = arith.constant 1.000000e+00 : f32
    %61 = vector.broadcast %cst_24 : f32 to vector<4x32xf32>
    %62 = arith.addf %61, %60 : vector<4x32xf32>
    %cst_25 = arith.constant 1.000000e+00 : f32
    %63 = vector.broadcast %cst_25 : f32 to vector<4x32xf32>
    %64 = arith.divf %63, %62 : vector<4x32xf32>
    %65 = vector.extract_strided_slice %51 {offsets = [0, 32], sizes = [4, 32], strides = [1, 1]} : vector<4x96xf32> to vector<4x32xf32>
    %66 = vector.extract_strided_slice %54 {offsets = [0, 32], sizes = [4, 32], strides = [1, 1]} : vector<4x96xf32> to vector<4x32xf32>
    %67 = arith.addf %65, %66 : vector<4x32xf32>
    %cst_26 = arith.constant 0.000000e+00 : f32
    %68 = vector.broadcast %cst_26 : f32 to vector<4x32xf32>
    %69 = arith.subf %68, %67 : vector<4x32xf32>
    %70 = math.exp %69 : vector<4x32xf32>
    %cst_27 = arith.constant 1.000000e+00 : f32
    %71 = vector.broadcast %cst_27 : f32 to vector<4x32xf32>
    %72 = arith.addf %71, %70 : vector<4x32xf32>
    %cst_28 = arith.constant 1.000000e+00 : f32
    %73 = vector.broadcast %cst_28 : f32 to vector<4x32xf32>
    %74 = arith.divf %73, %72 : vector<4x32xf32>
    %75 = vector.extract_strided_slice %51 {offsets = [0, 64], sizes = [4, 32], strides = [1, 1]} : vector<4x96xf32> to vector<4x32xf32>
    %76 = vector.extract_strided_slice %54 {offsets = [0, 64], sizes = [4, 32], strides = [1, 1]} : vector<4x96xf32> to vector<4x32xf32>
    %77 = arith.mulf %64, %76 : vector<4x32xf32>
    %78 = arith.addf %75, %77 : vector<4x32xf32>
    %79 = math.tanh %78 : vector<4x32xf32>
    %cst_29 = arith.constant 1.000000e+00 : f32
    %80 = vector.broadcast %cst_29 : f32 to vector<4x32xf32>
    %81 = arith.subf %80, %74 : vector<4x32xf32>
    %82 = arith.mulf %81, %79 : vector<4x32xf32>
    %83 = arith.mulf %74, %43 : vector<4x32xf32>
    %84 = arith.addf %82, %83 : vector<4x32xf32>
    %85 = arith.index_cast %c1_i32 : i32 to index
    %c0_30 = arith.constant 0 : index
    %c0_31 = arith.constant 0 : index
    %86 = vector.load %arg6[%85, %c0_30, %c0_31] : memref<10x4x32xf32, #tpu.memory_space<vmem>>, vector<1x4x32xf32>
    %87 = vector.shape_cast %86 : vector<1x4x32xf32> to vector<4x32xf32>
    %88 = vector.shape_cast %84 : vector<4x32xf32> to vector<1x4x32xf32>
    tpu.vector_store %arg6[%85, %c0_30, %c0_31], %88 {strides = array<i32>} : memref<10x4x32xf32, #tpu.memory_space<vmem>>, vector<1x4x32xf32>,
    %c2_i32 = arith.constant 2 : i32
    %89 = arith.index_cast %c2_i32 : i32 to index
    %c0_32 = arith.constant 0 : index
    %c0_33 = arith.constant 0 : index
    %90 = vector.load %arg1[%89, %c0_32, %c0_33] : memref<10x4x96xf32, #tpu.memory_space<vmem>>, vector<1x4x96xf32>
    %91 = vector.shape_cast %90 : vector<1x4x96xf32> to vector<4x96xf32>
    %92 = arith.addf %91, %4 : vector<4x96xf32>
    %cst_34 = arith.constant dense<0.000000e+00> : vector<4x96xf32>
    %93 = tpu.matmul %84, %3, %cst_34 {dimension_numbers = #tpu.dot_dimension_numbers<[1], [0], [0], [1], [0, 0, 1, 1], [], []>} : vector<4x32xf32>, vector<32x96xf32>, vector<4x96xf32> -> vector<4x96xf32>
    %94 = vector.broadcast %5 : vector<1x96xf32> to vector<4x96xf32>
    %95 = arith.addf %93, %94 : vector<4x96xf32>
    %96 = vector.extract_strided_slice %92 {offsets = [0, 0], sizes = [4, 32], strides = [1, 1]} : vector<4x96xf32> to vector<4x32xf32>
    %97 = vector.extract_strided_slice %95 {offsets = [0, 0], sizes = [4, 32], strides = [1, 1]} : vector<4x96xf32> to vector<4x32xf32>
    %98 = arith.addf %96, %97 : vector<4x32xf32>
    %cst_35 = arith.constant 0.000000e+00 : f32
    %99 = vector.broadcast %cst_35 : f32 to vector<4x32xf32>
    %100 = arith.subf %99, %98 : vector<4x32xf32>
    %101 = math.exp %100 : vector<4x32xf32>
    %cst_36 = arith.constant 1.000000e+00 : f32
    %102 = vector.broadcast %cst_36 : f32 to vector<4x32xf32>
    %103 = arith.addf %102, %101 : vector<4x32xf32>
    %cst_37 = arith.constant 1.000000e+00 : f32
    %104 = vector.broadcast %cst_37 : f32 to vector<4x32xf32>
    %105 = arith.divf %104, %103 : vector<4x32xf32>
    %106 = vector.extract_strided_slice %92 {offsets = [0, 32], sizes = [4, 32], strides = [1, 1]} : vector<4x96xf32> to vector<4x32xf32>
    %107 = vector.extract_strided_slice %95 {offsets = [0, 32], sizes = [4, 32], strides = [1, 1]} : vector<4x96xf32> to vector<4x32xf32>
    %108 = arith.addf %106, %107 : vector<4x32xf32>
    %cst_38 = arith.constant 0.000000e+00 : f32
    %109 = vector.broadcast %cst_38 : f32 to vector<4x32xf32>
    %110 = arith.subf %109, %108 : vector<4x32xf32>
    %111 = math.exp %110 : vector<4x32xf32>
    %cst_39 = arith.constant 1.000000e+00 : f32
    %112 = vector.broadcast %cst_39 : f32 to vector<4x32xf32>
    %113 = arith.addf %112, %111 : vector<4x32xf32>
    %cst_40 = arith.constant 1.000000e+00 : f32
    %114 = vector.broadcast %cst_40 : f32 to vector<4x32xf32>
    %115 = arith.divf %114, %113 : vector<4x32xf32>
    %116 = vector.extract_strided_slice %92 {offsets = [0, 64], sizes = [4, 32], strides = [1, 1]} : vector<4x96xf32> to vector<4x32xf32>
    %117 = vector.extract_strided_slice %95 {offsets = [0, 64], sizes = [4, 32], strides = [1, 1]} : vector<4x96xf32> to vector<4x32xf32>
    %118 = arith.mulf %105, %117 : vector<4x32xf32>
    %119 = arith.addf %116, %118 : vector<4x32xf32>
    %120 = math.tanh %119 : vector<4x32xf32>
    %cst_41 = arith.constant 1.000000e+00 : f32
    %121 = vector.broadcast %cst_41 : f32 to vector<4x32xf32>
    %122 = arith.subf %121, %115 : vector<4x32xf32>
    %123 = arith.mulf %122, %120 : vector<4x32xf32>
    %124 = arith.mulf %115, %84 : vector<4x32xf32>
    %125 = arith.addf %123, %124 : vector<4x32xf32>
    %126 = arith.index_cast %c2_i32 : i32 to index
    %c0_42 = arith.constant 0 : index
    %c0_43 = arith.constant 0 : index
    %127 = vector.load %arg6[%126, %c0_42, %c0_43] : memref<10x4x32xf32, #tpu.memory_space<vmem>>, vector<1x4x32xf32>
    %128 = vector.shape_cast %127 : vector<1x4x32xf32> to vector<4x32xf32>
    %129 = vector.shape_cast %125 : vector<4x32xf32> to vector<1x4x32xf32>
    tpu.vector_store %arg6[%126, %c0_42, %c0_43], %129 {strides = array<i32>} : memref<10x4x32xf32, #tpu.memory_space<vmem>>, vector<1x4x32xf32>,
    %c3_i32 = arith.constant 3 : i32
    %130 = arith.index_cast %c3_i32 : i32 to index
    %c0_44 = arith.constant 0 : index
    %c0_45 = arith.constant 0 : index
    %131 = vector.load %arg1[%130, %c0_44, %c0_45] : memref<10x4x96xf32, #tpu.memory_space<vmem>>, vector<1x4x96xf32>
    %132 = vector.shape_cast %131 : vector<1x4x96xf32> to vector<4x96xf32>
    %133 = arith.addf %132, %4 : vector<4x96xf32>
    %cst_46 = arith.constant dense<0.000000e+00> : vector<4x96xf32>
    %134 = tpu.matmul %125, %3, %cst_46 {dimension_numbers = #tpu.dot_dimension_numbers<[1], [0], [0], [1], [0, 0, 1, 1], [], []>} : vector<4x32xf32>, vector<32x96xf32>, vector<4x96xf32> -> vector<4x96xf32>
    %135 = vector.broadcast %5 : vector<1x96xf32> to vector<4x96xf32>
    %136 = arith.addf %134, %135 : vector<4x96xf32>
    %137 = vector.extract_strided_slice %133 {offsets = [0, 0], sizes = [4, 32], strides = [1, 1]} : vector<4x96xf32> to vector<4x32xf32>
    %138 = vector.extract_strided_slice %136 {offsets = [0, 0], sizes = [4, 32], strides = [1, 1]} : vector<4x96xf32> to vector<4x32xf32>
    %139 = arith.addf %137, %138 : vector<4x32xf32>
    %cst_47 = arith.constant 0.000000e+00 : f32
    %140 = vector.broadcast %cst_47 : f32 to vector<4x32xf32>
    %141 = arith.subf %140, %139 : vector<4x32xf32>
    %142 = math.exp %141 : vector<4x32xf32>
    %cst_48 = arith.constant 1.000000e+00 : f32
    %143 = vector.broadcast %cst_48 : f32 to vector<4x32xf32>
    %144 = arith.addf %143, %142 : vector<4x32xf32>
    %cst_49 = arith.constant 1.000000e+00 : f32
    %145 = vector.broadcast %cst_49 : f32 to vector<4x32xf32>
    %146 = arith.divf %145, %144 : vector<4x32xf32>
    %147 = vector.extract_strided_slice %133 {offsets = [0, 32], sizes = [4, 32], strides = [1, 1]} : vector<4x96xf32> to vector<4x32xf32>
    %148 = vector.extract_strided_slice %136 {offsets = [0, 32], sizes = [4, 32], strides = [1, 1]} : vector<4x96xf32> to vector<4x32xf32>
    %149 = arith.addf %147, %148 : vector<4x32xf32>
    %cst_50 = arith.constant 0.000000e+00 : f32
    %150 = vector.broadcast %cst_50 : f32 to vector<4x32xf32>
    %151 = arith.subf %150, %149 : vector<4x32xf32>
    %152 = math.exp %151 : vector<4x32xf32>
    %cst_51 = arith.constant 1.000000e+00 : f32
    %153 = vector.broadcast %cst_51 : f32 to vector<4x32xf32>
    %154 = arith.addf %153, %152 : vector<4x32xf32>
    %cst_52 = arith.constant 1.000000e+00 : f32
    %155 = vector.broadcast %cst_52 : f32 to vector<4x32xf32>
    %156 = arith.divf %155, %154 : vector<4x32xf32>
    %157 = vector.extract_strided_slice %133 {offsets = [0, 64], sizes = [4, 32], strides = [1, 1]} : vector<4x96xf32> to vector<4x32xf32>
    %158 = vector.extract_strided_slice %136 {offsets = [0, 64], sizes = [4, 32], strides = [1, 1]} : vector<4x96xf32> to vector<4x32xf32>
    %159 = arith.mulf %146, %158 : vector<4x32xf32>
    %160 = arith.addf %157, %159 : vector<4x32xf32>
    %161 = math.tanh %160 : vector<4x32xf32>
    %cst_53 = arith.constant 1.000000e+00 : f32
    %162 = vector.broadcast %cst_53 : f32 to vector<4x32xf32>
    %163 = arith.subf %162, %156 : vector<4x32xf32>
    %164 = arith.mulf %163, %161 : vector<4x32xf32>
    %165 = arith.mulf %156, %125 : vector<4x32xf32>
    %166 = arith.addf %164, %165 : vector<4x32xf32>
    %167 = arith.index_cast %c3_i32 : i32 to index
    %c0_54 = arith.constant 0 : index
    %c0_55 = arith.constant 0 : index
    %168 = vector.load %arg6[%167, %c0_54, %c0_55] : memref<10x4x32xf32, #tpu.memory_space<vmem>>, vector<1x4x32xf32>
    %169 = vector.shape_cast %168 : vector<1x4x32xf32> to vector<4x32xf32>
    %170 = vector.shape_cast %166 : vector<4x32xf32> to vector<1x4x32xf32>
    tpu.vector_store %arg6[%167, %c0_54, %c0_55], %170 {strides = array<i32>} : memref<10x4x32xf32, #tpu.memory_space<vmem>>, vector<1x4x32xf32>,
    %c4_i32 = arith.constant 4 : i32
    %171 = arith.index_cast %c4_i32 : i32 to index
    %c0_56 = arith.constant 0 : index
    %c0_57 = arith.constant 0 : index
    %172 = vector.load %arg1[%171, %c0_56, %c0_57] : memref<10x4x96xf32, #tpu.memory_space<vmem>>, vector<1x4x96xf32>
    %173 = vector.shape_cast %172 : vector<1x4x96xf32> to vector<4x96xf32>
    %174 = arith.addf %173, %4 : vector<4x96xf32>
    %cst_58 = arith.constant dense<0.000000e+00> : vector<4x96xf32>
    %175 = tpu.matmul %166, %3, %cst_58 {dimension_numbers = #tpu.dot_dimension_numbers<[1], [0], [0], [1], [0, 0, 1, 1], [], []>} : vector<4x32xf32>, vector<32x96xf32>, vector<4x96xf32> -> vector<4x96xf32>
    %176 = vector.broadcast %5 : vector<1x96xf32> to vector<4x96xf32>
    %177 = arith.addf %175, %176 : vector<4x96xf32>
    %178 = vector.extract_strided_slice %174 {offsets = [0, 0], sizes = [4, 32], strides = [1, 1]} : vector<4x96xf32> to vector<4x32xf32>
    %179 = vector.extract_strided_slice %177 {offsets = [0, 0], sizes = [4, 32], strides = [1, 1]} : vector<4x96xf32> to vector<4x32xf32>
    %180 = arith.addf %178, %179 : vector<4x32xf32>
    %cst_59 = arith.constant 0.000000e+00 : f32
    %181 = vector.broadcast %cst_59 : f32 to vector<4x32xf32>
    %182 = arith.subf %181, %180 : vector<4x32xf32>
    %183 = math.exp %182 : vector<4x32xf32>
    %cst_60 = arith.constant 1.000000e+00 : f32
    %184 = vector.broadcast %cst_60 : f32 to vector<4x32xf32>
    %185 = arith.addf %184, %183 : vector<4x32xf32>
    %cst_61 = arith.constant 1.000000e+00 : f32
    %186 = vector.broadcast %cst_61 : f32 to vector<4x32xf32>
    %187 = arith.divf %186, %185 : vector<4x32xf32>
    %188 = vector.extract_strided_slice %174 {offsets = [0, 32], sizes = [4, 32], strides = [1, 1]} : vector<4x96xf32> to vector<4x32xf32>
    %189 = vector.extract_strided_slice %177 {offsets = [0, 32], sizes = [4, 32], strides = [1, 1]} : vector<4x96xf32> to vector<4x32xf32>
    %190 = arith.addf %188, %189 : vector<4x32xf32>
    %cst_62 = arith.constant 0.000000e+00 : f32
    %191 = vector.broadcast %cst_62 : f32 to vector<4x32xf32>
    %192 = arith.subf %191, %190 : vector<4x32xf32>
    %193 = math.exp %192 : vector<4x32xf32>
    %cst_63 = arith.constant 1.000000e+00 : f32
    %194 = vector.broadcast %cst_63 : f32 to vector<4x32xf32>
    %195 = arith.addf %194, %193 : vector<4x32xf32>
    %cst_64 = arith.constant 1.000000e+00 : f32
    %196 = vector.broadcast %cst_64 : f32 to vector<4x32xf32>
    %197 = arith.divf %196, %195 : vector<4x32xf32>
    %198 = vector.extract_strided_slice %174 {offsets = [0, 64], sizes = [4, 32], strides = [1, 1]} : vector<4x96xf32> to vector<4x32xf32>
    %199 = vector.extract_strided_slice %177 {offsets = [0, 64], sizes = [4, 32], strides = [1, 1]} : vector<4x96xf32> to vector<4x32xf32>
    %200 = arith.mulf %187, %199 : vector<4x32xf32>
    %201 = arith.addf %198, %200 : vector<4x32xf32>
    %202 = math.tanh %201 : vector<4x32xf32>
    %cst_65 = arith.constant 1.000000e+00 : f32
    %203 = vector.broadcast %cst_65 : f32 to vector<4x32xf32>
    %204 = arith.subf %203, %197 : vector<4x32xf32>
    %205 = arith.mulf %204, %202 : vector<4x32xf32>
    %206 = arith.mulf %197, %166 : vector<4x32xf32>
    %207 = arith.addf %205, %206 : vector<4x32xf32>
    %208 = arith.index_cast %c4_i32 : i32 to index
    %c0_66 = arith.constant 0 : index
    %c0_67 = arith.constant 0 : index
    %209 = vector.load %arg6[%208, %c0_66, %c0_67] : memref<10x4x32xf32, #tpu.memory_space<vmem>>, vector<1x4x32xf32>
    %210 = vector.shape_cast %209 : vector<1x4x32xf32> to vector<4x32xf32>
    %211 = vector.shape_cast %207 : vector<4x32xf32> to vector<1x4x32xf32>
    tpu.vector_store %arg6[%208, %c0_66, %c0_67], %211 {strides = array<i32>} : memref<10x4x32xf32, #tpu.memory_space<vmem>>, vector<1x4x32xf32>,
    %c5_i32 = arith.constant 5 : i32
    %212 = arith.index_cast %c5_i32 : i32 to index
    %c0_68 = arith.constant 0 : index
    %c0_69 = arith.constant 0 : index
    %213 = vector.load %arg1[%212, %c0_68, %c0_69] : memref<10x4x96xf32, #tpu.memory_space<vmem>>, vector<1x4x96xf32>
    %214 = vector.shape_cast %213 : vector<1x4x96xf32> to vector<4x96xf32>
    %215 = arith.addf %214, %4 : vector<4x96xf32>
    %cst_70 = arith.constant dense<0.000000e+00> : vector<4x96xf32>
    %216 = tpu.matmul %207, %3, %cst_70 {dimension_numbers = #tpu.dot_dimension_numbers<[1], [0], [0], [1], [0, 0, 1, 1], [], []>} : vector<4x32xf32>, vector<32x96xf32>, vector<4x96xf32> -> vector<4x96xf32>
    %217 = vector.broadcast %5 : vector<1x96xf32> to vector<4x96xf32>
    %218 = arith.addf %216, %217 : vector<4x96xf32>
    %219 = vector.extract_strided_slice %215 {offsets = [0, 0], sizes = [4, 32], strides = [1, 1]} : vector<4x96xf32> to vector<4x32xf32>
    %220 = vector.extract_strided_slice %218 {offsets = [0, 0], sizes = [4, 32], strides = [1, 1]} : vector<4x96xf32> to vector<4x32xf32>
    %221 = arith.addf %219, %220 : vector<4x32xf32>
    %cst_71 = arith.constant 0.000000e+00 : f32
    %222 = vector.broadcast %cst_71 : f32 to vector<4x32xf32>
    %223 = arith.subf %222, %221 : vector<4x32xf32>
    %224 = math.exp %223 : vector<4x32xf32>
    %cst_72 = arith.constant 1.000000e+00 : f32
    %225 = vector.broadcast %cst_72 : f32 to vector<4x32xf32>
    %226 = arith.addf %225, %224 : vector<4x32xf32>
    %cst_73 = arith.constant 1.000000e+00 : f32
    %227 = vector.broadcast %cst_73 : f32 to vector<4x32xf32>
    %228 = arith.divf %227, %226 : vector<4x32xf32>
    %229 = vector.extract_strided_slice %215 {offsets = [0, 32], sizes = [4, 32], strides = [1, 1]} : vector<4x96xf32> to vector<4x32xf32>
    %230 = vector.extract_strided_slice %218 {offsets = [0, 32], sizes = [4, 32], strides = [1, 1]} : vector<4x96xf32> to vector<4x32xf32>
    %231 = arith.addf %229, %230 : vector<4x32xf32>
    %cst_74 = arith.constant 0.000000e+00 : f32
    %232 = vector.broadcast %cst_74 : f32 to vector<4x32xf32>
    %233 = arith.subf %232, %231 : vector<4x32xf32>
    %234 = math.exp %233 : vector<4x32xf32>
    %cst_75 = arith.constant 1.000000e+00 : f32
    %235 = vector.broadcast %cst_75 : f32 to vector<4x32xf32>
    %236 = arith.addf %235, %234 : vector<4x32xf32>
    %cst_76 = arith.constant 1.000000e+00 : f32
    %237 = vector.broadcast %cst_76 : f32 to vector<4x32xf32>
    %238 = arith.divf %237, %236 : vector<4x32xf32>
    %239 = vector.extract_strided_slice %215 {offsets = [0, 64], sizes = [4, 32], strides = [1, 1]} : vector<4x96xf32> to vector<4x32xf32>
    %240 = vector.extract_strided_slice %218 {offsets = [0, 64], sizes = [4, 32], strides = [1, 1]} : vector<4x96xf32> to vector<4x32xf32>
    %241 = arith.mulf %228, %240 : vector<4x32xf32>
    %242 = arith.addf %239, %241 : vector<4x32xf32>
    %243 = math.tanh %242 : vector<4x32xf32>
    %cst_77 = arith.constant 1.000000e+00 : f32
    %244 = vector.broadcast %cst_77 : f32 to vector<4x32xf32>
    %245 = arith.subf %244, %238 : vector<4x32xf32>
    %246 = arith.mulf %245, %243 : vector<4x32xf32>
    %247 = arith.mulf %238, %207 : vector<4x32xf32>
    %248 = arith.addf %246, %247 : vector<4x32xf32>
    %249 = arith.index_cast %c5_i32 : i32 to index
    %c0_78 = arith.constant 0 : index
    %c0_79 = arith.constant 0 : index
    %250 = vector.load %arg6[%249, %c0_78, %c0_79] : memref<10x4x32xf32, #tpu.memory_space<vmem>>, vector<1x4x32xf32>
    %251 = vector.shape_cast %250 : vector<1x4x32xf32> to vector<4x32xf32>
    %252 = vector.shape_cast %248 : vector<4x32xf32> to vector<1x4x32xf32>
    tpu.vector_store %arg6[%249, %c0_78, %c0_79], %252 {strides = array<i32>} : memref<10x4x32xf32, #tpu.memory_space<vmem>>, vector<1x4x32xf32>,
    %c6_i32 = arith.constant 6 : i32
    %253 = arith.index_cast %c6_i32 : i32 to index
    %c0_80 = arith.constant 0 : index
    %c0_81 = arith.constant 0 : index
    %254 = vector.load %arg1[%253, %c0_80, %c0_81] : memref<10x4x96xf32, #tpu.memory_space<vmem>>, vector<1x4x96xf32>
    %255 = vector.shape_cast %254 : vector<1x4x96xf32> to vector<4x96xf32>
    %256 = arith.addf %255, %4 : vector<4x96xf32>
    %cst_82 = arith.constant dense<0.000000e+00> : vector<4x96xf32>
    %257 = tpu.matmul %248, %3, %cst_82 {dimension_numbers = #tpu.dot_dimension_numbers<[1], [0], [0], [1], [0, 0, 1, 1], [], []>} : vector<4x32xf32>, vector<32x96xf32>, vector<4x96xf32> -> vector<4x96xf32>
    %258 = vector.broadcast %5 : vector<1x96xf32> to vector<4x96xf32>
    %259 = arith.addf %257, %258 : vector<4x96xf32>
    %260 = vector.extract_strided_slice %256 {offsets = [0, 0], sizes = [4, 32], strides = [1, 1]} : vector<4x96xf32> to vector<4x32xf32>
    %261 = vector.extract_strided_slice %259 {offsets = [0, 0], sizes = [4, 32], strides = [1, 1]} : vector<4x96xf32> to vector<4x32xf32>
    %262 = arith.addf %260, %261 : vector<4x32xf32>
    %cst_83 = arith.constant 0.000000e+00 : f32
    %263 = vector.broadcast %cst_83 : f32 to vector<4x32xf32>
    %264 = arith.subf %263, %262 : vector<4x32xf32>
    %265 = math.exp %264 : vector<4x32xf32>
    %cst_84 = arith.constant 1.000000e+00 : f32
    %266 = vector.broadcast %cst_84 : f32 to vector<4x32xf32>
    %267 = arith.addf %266, %265 : vector<4x32xf32>
    %cst_85 = arith.constant 1.000000e+00 : f32
    %268 = vector.broadcast %cst_85 : f32 to vector<4x32xf32>
    %269 = arith.divf %268, %267 : vector<4x32xf32>
    %270 = vector.extract_strided_slice %256 {offsets = [0, 32], sizes = [4, 32], strides = [1, 1]} : vector<4x96xf32> to vector<4x32xf32>
    %271 = vector.extract_strided_slice %259 {offsets = [0, 32], sizes = [4, 32], strides = [1, 1]} : vector<4x96xf32> to vector<4x32xf32>
    %272 = arith.addf %270, %271 : vector<4x32xf32>
    %cst_86 = arith.constant 0.000000e+00 : f32
    %273 = vector.broadcast %cst_86 : f32 to vector<4x32xf32>
    %274 = arith.subf %273, %272 : vector<4x32xf32>
    %275 = math.exp %274 : vector<4x32xf32>
    %cst_87 = arith.constant 1.000000e+00 : f32
    %276 = vector.broadcast %cst_87 : f32 to vector<4x32xf32>
    %277 = arith.addf %276, %275 : vector<4x32xf32>
    %cst_88 = arith.constant 1.000000e+00 : f32
    %278 = vector.broadcast %cst_88 : f32 to vector<4x32xf32>
    %279 = arith.divf %278, %277 : vector<4x32xf32>
    %280 = vector.extract_strided_slice %256 {offsets = [0, 64], sizes = [4, 32], strides = [1, 1]} : vector<4x96xf32> to vector<4x32xf32>
    %281 = vector.extract_strided_slice %259 {offsets = [0, 64], sizes = [4, 32], strides = [1, 1]} : vector<4x96xf32> to vector<4x32xf32>
    %282 = arith.mulf %269, %281 : vector<4x32xf32>
    %283 = arith.addf %280, %282 : vector<4x32xf32>
    %284 = math.tanh %283 : vector<4x32xf32>
    %cst_89 = arith.constant 1.000000e+00 : f32
    %285 = vector.broadcast %cst_89 : f32 to vector<4x32xf32>
    %286 = arith.subf %285, %279 : vector<4x32xf32>
    %287 = arith.mulf %286, %284 : vector<4x32xf32>
    %288 = arith.mulf %279, %248 : vector<4x32xf32>
    %289 = arith.addf %287, %288 : vector<4x32xf32>
    %290 = arith.index_cast %c6_i32 : i32 to index
    %c0_90 = arith.constant 0 : index
    %c0_91 = arith.constant 0 : index
    %291 = vector.load %arg6[%290, %c0_90, %c0_91] : memref<10x4x32xf32, #tpu.memory_space<vmem>>, vector<1x4x32xf32>
    %292 = vector.shape_cast %291 : vector<1x4x32xf32> to vector<4x32xf32>
    %293 = vector.shape_cast %289 : vector<4x32xf32> to vector<1x4x32xf32>
    tpu.vector_store %arg6[%290, %c0_90, %c0_91], %293 {strides = array<i32>} : memref<10x4x32xf32, #tpu.memory_space<vmem>>, vector<1x4x32xf32>,
    %c7_i32 = arith.constant 7 : i32
    %294 = arith.index_cast %c7_i32 : i32 to index
    %c0_92 = arith.constant 0 : index
    %c0_93 = arith.constant 0 : index
    %295 = vector.load %arg1[%294, %c0_92, %c0_93] : memref<10x4x96xf32, #tpu.memory_space<vmem>>, vector<1x4x96xf32>
    %296 = vector.shape_cast %295 : vector<1x4x96xf32> to vector<4x96xf32>
    %297 = arith.addf %296, %4 : vector<4x96xf32>
    %cst_94 = arith.constant dense<0.000000e+00> : vector<4x96xf32>
    %298 = tpu.matmul %289, %3, %cst_94 {dimension_numbers = #tpu.dot_dimension_numbers<[1], [0], [0], [1], [0, 0, 1, 1], [], []>} : vector<4x32xf32>, vector<32x96xf32>, vector<4x96xf32> -> vector<4x96xf32>
    %299 = vector.broadcast %5 : vector<1x96xf32> to vector<4x96xf32>
    %300 = arith.addf %298, %299 : vector<4x96xf32>
    %301 = vector.extract_strided_slice %297 {offsets = [0, 0], sizes = [4, 32], strides = [1, 1]} : vector<4x96xf32> to vector<4x32xf32>
    %302 = vector.extract_strided_slice %300 {offsets = [0, 0], sizes = [4, 32], strides = [1, 1]} : vector<4x96xf32> to vector<4x32xf32>
    %303 = arith.addf %301, %302 : vector<4x32xf32>
    %cst_95 = arith.constant 0.000000e+00 : f32
    %304 = vector.broadcast %cst_95 : f32 to vector<4x32xf32>
    %305 = arith.subf %304, %303 : vector<4x32xf32>
    %306 = math.exp %305 : vector<4x32xf32>
    %cst_96 = arith.constant 1.000000e+00 : f32
    %307 = vector.broadcast %cst_96 : f32 to vector<4x32xf32>
    %308 = arith.addf %307, %306 : vector<4x32xf32>
    %cst_97 = arith.constant 1.000000e+00 : f32
    %309 = vector.broadcast %cst_97 : f32 to vector<4x32xf32>
    %310 = arith.divf %309, %308 : vector<4x32xf32>
    %311 = vector.extract_strided_slice %297 {offsets = [0, 32], sizes = [4, 32], strides = [1, 1]} : vector<4x96xf32> to vector<4x32xf32>
    %312 = vector.extract_strided_slice %300 {offsets = [0, 32], sizes = [4, 32], strides = [1, 1]} : vector<4x96xf32> to vector<4x32xf32>
    %313 = arith.addf %311, %312 : vector<4x32xf32>
    %cst_98 = arith.constant 0.000000e+00 : f32
    %314 = vector.broadcast %cst_98 : f32 to vector<4x32xf32>
    %315 = arith.subf %314, %313 : vector<4x32xf32>
    %316 = math.exp %315 : vector<4x32xf32>
    %cst_99 = arith.constant 1.000000e+00 : f32
    %317 = vector.broadcast %cst_99 : f32 to vector<4x32xf32>
    %318 = arith.addf %317, %316 : vector<4x32xf32>
    %cst_100 = arith.constant 1.000000e+00 : f32
    %319 = vector.broadcast %cst_100 : f32 to vector<4x32xf32>
    %320 = arith.divf %319, %318 : vector<4x32xf32>
    %321 = vector.extract_strided_slice %297 {offsets = [0, 64], sizes = [4, 32], strides = [1, 1]} : vector<4x96xf32> to vector<4x32xf32>
    %322 = vector.extract_strided_slice %300 {offsets = [0, 64], sizes = [4, 32], strides = [1, 1]} : vector<4x96xf32> to vector<4x32xf32>
    %323 = arith.mulf %310, %322 : vector<4x32xf32>
    %324 = arith.addf %321, %323 : vector<4x32xf32>
    %325 = math.tanh %324 : vector<4x32xf32>
    %cst_101 = arith.constant 1.000000e+00 : f32
    %326 = vector.broadcast %cst_101 : f32 to vector<4x32xf32>
    %327 = arith.subf %326, %320 : vector<4x32xf32>
    %328 = arith.mulf %327, %325 : vector<4x32xf32>
    %329 = arith.mulf %320, %289 : vector<4x32xf32>
    %330 = arith.addf %328, %329 : vector<4x32xf32>
    %331 = arith.index_cast %c7_i32 : i32 to index
    %c0_102 = arith.constant 0 : index
    %c0_103 = arith.constant 0 : index
    %332 = vector.load %arg6[%331, %c0_102, %c0_103] : memref<10x4x32xf32, #tpu.memory_space<vmem>>, vector<1x4x32xf32>
    %333 = vector.shape_cast %332 : vector<1x4x32xf32> to vector<4x32xf32>
    %334 = vector.shape_cast %330 : vector<4x32xf32> to vector<1x4x32xf32>
    tpu.vector_store %arg6[%331, %c0_102, %c0_103], %334 {strides = array<i32>} : memref<10x4x32xf32, #tpu.memory_space<vmem>>, vector<1x4x32xf32>,
    %c8_i32 = arith.constant 8 : i32
    %335 = arith.index_cast %c8_i32 : i32 to index
    %c0_104 = arith.constant 0 : index
    %c0_105 = arith.constant 0 : index
    %336 = vector.load %arg1[%335, %c0_104, %c0_105] : memref<10x4x96xf32, #tpu.memory_space<vmem>>, vector<1x4x96xf32>
    %337 = vector.shape_cast %336 : vector<1x4x96xf32> to vector<4x96xf32>
    %338 = arith.addf %337, %4 : vector<4x96xf32>
    %cst_106 = arith.constant dense<0.000000e+00> : vector<4x96xf32>
    %339 = tpu.matmul %330, %3, %cst_106 {dimension_numbers = #tpu.dot_dimension_numbers<[1], [0], [0], [1], [0, 0, 1, 1], [], []>} : vector<4x32xf32>, vector<32x96xf32>, vector<4x96xf32> -> vector<4x96xf32>
    %340 = vector.broadcast %5 : vector<1x96xf32> to vector<4x96xf32>
    %341 = arith.addf %339, %340 : vector<4x96xf32>
    %342 = vector.extract_strided_slice %338 {offsets = [0, 0], sizes = [4, 32], strides = [1, 1]} : vector<4x96xf32> to vector<4x32xf32>
    %343 = vector.extract_strided_slice %341 {offsets = [0, 0], sizes = [4, 32], strides = [1, 1]} : vector<4x96xf32> to vector<4x32xf32>
    %344 = arith.addf %342, %343 : vector<4x32xf32>
    %cst_107 = arith.constant 0.000000e+00 : f32
    %345 = vector.broadcast %cst_107 : f32 to vector<4x32xf32>
    %346 = arith.subf %345, %344 : vector<4x32xf32>
    %347 = math.exp %346 : vector<4x32xf32>
    %cst_108 = arith.constant 1.000000e+00 : f32
    %348 = vector.broadcast %cst_108 : f32 to vector<4x32xf32>
    %349 = arith.addf %348, %347 : vector<4x32xf32>
    %cst_109 = arith.constant 1.000000e+00 : f32
    %350 = vector.broadcast %cst_109 : f32 to vector<4x32xf32>
    %351 = arith.divf %350, %349 : vector<4x32xf32>
    %352 = vector.extract_strided_slice %338 {offsets = [0, 32], sizes = [4, 32], strides = [1, 1]} : vector<4x96xf32> to vector<4x32xf32>
    %353 = vector.extract_strided_slice %341 {offsets = [0, 32], sizes = [4, 32], strides = [1, 1]} : vector<4x96xf32> to vector<4x32xf32>
    %354 = arith.addf %352, %353 : vector<4x32xf32>
    %cst_110 = arith.constant 0.000000e+00 : f32
    %355 = vector.broadcast %cst_110 : f32 to vector<4x32xf32>
    %356 = arith.subf %355, %354 : vector<4x32xf32>
    %357 = math.exp %356 : vector<4x32xf32>
    %cst_111 = arith.constant 1.000000e+00 : f32
    %358 = vector.broadcast %cst_111 : f32 to vector<4x32xf32>
    %359 = arith.addf %358, %357 : vector<4x32xf32>
    %cst_112 = arith.constant 1.000000e+00 : f32
    %360 = vector.broadcast %cst_112 : f32 to vector<4x32xf32>
    %361 = arith.divf %360, %359 : vector<4x32xf32>
    %362 = vector.extract_strided_slice %338 {offsets = [0, 64], sizes = [4, 32], strides = [1, 1]} : vector<4x96xf32> to vector<4x32xf32>
    %363 = vector.extract_strided_slice %341 {offsets = [0, 64], sizes = [4, 32], strides = [1, 1]} : vector<4x96xf32> to vector<4x32xf32>
    %364 = arith.mulf %351, %363 : vector<4x32xf32>
    %365 = arith.addf %362, %364 : vector<4x32xf32>
    %366 = math.tanh %365 : vector<4x32xf32>
    %cst_113 = arith.constant 1.000000e+00 : f32
    %367 = vector.broadcast %cst_113 : f32 to vector<4x32xf32>
    %368 = arith.subf %367, %361 : vector<4x32xf32>
    %369 = arith.mulf %368, %366 : vector<4x32xf32>
    %370 = arith.mulf %361, %330 : vector<4x32xf32>
    %371 = arith.addf %369, %370 : vector<4x32xf32>
    %372 = arith.index_cast %c8_i32 : i32 to index
    %c0_114 = arith.constant 0 : index
    %c0_115 = arith.constant 0 : index
    %373 = vector.load %arg6[%372, %c0_114, %c0_115] : memref<10x4x32xf32, #tpu.memory_space<vmem>>, vector<1x4x32xf32>
    %374 = vector.shape_cast %373 : vector<1x4x32xf32> to vector<4x32xf32>
    %375 = vector.shape_cast %371 : vector<4x32xf32> to vector<1x4x32xf32>
    tpu.vector_store %arg6[%372, %c0_114, %c0_115], %375 {strides = array<i32>} : memref<10x4x32xf32, #tpu.memory_space<vmem>>, vector<1x4x32xf32>,
    %c9_i32 = arith.constant 9 : i32
    %376 = arith.index_cast %c9_i32 : i32 to index
    %c0_116 = arith.constant 0 : index
    %c0_117 = arith.constant 0 : index
    %377 = vector.load %arg1[%376, %c0_116, %c0_117] : memref<10x4x96xf32, #tpu.memory_space<vmem>>, vector<1x4x96xf32>
    %378 = vector.shape_cast %377 : vector<1x4x96xf32> to vector<4x96xf32>
    %379 = arith.addf %378, %4 : vector<4x96xf32>
    %cst_118 = arith.constant dense<0.000000e+00> : vector<4x96xf32>
    %380 = tpu.matmul %371, %3, %cst_118 {dimension_numbers = #tpu.dot_dimension_numbers<[1], [0], [0], [1], [0, 0, 1, 1], [], []>} : vector<4x32xf32>, vector<32x96xf32>, vector<4x96xf32> -> vector<4x96xf32>
    %381 = vector.broadcast %5 : vector<1x96xf32> to vector<4x96xf32>
    %382 = arith.addf %380, %381 : vector<4x96xf32>
    %383 = vector.extract_strided_slice %379 {offsets = [0, 0], sizes = [4, 32], strides = [1, 1]} : vector<4x96xf32> to vector<4x32xf32>
    %384 = vector.extract_strided_slice %382 {offsets = [0, 0], sizes = [4, 32], strides = [1, 1]} : vector<4x96xf32> to vector<4x32xf32>
    %385 = arith.addf %383, %384 : vector<4x32xf32>
    %cst_119 = arith.constant 0.000000e+00 : f32
    %386 = vector.broadcast %cst_119 : f32 to vector<4x32xf32>
    %387 = arith.subf %386, %385 : vector<4x32xf32>
    %388 = math.exp %387 : vector<4x32xf32>
    %cst_120 = arith.constant 1.000000e+00 : f32
    %389 = vector.broadcast %cst_120 : f32 to vector<4x32xf32>
    %390 = arith.addf %389, %388 : vector<4x32xf32>
    %cst_121 = arith.constant 1.000000e+00 : f32
    %391 = vector.broadcast %cst_121 : f32 to vector<4x32xf32>
    %392 = arith.divf %391, %390 : vector<4x32xf32>
    %393 = vector.extract_strided_slice %379 {offsets = [0, 32], sizes = [4, 32], strides = [1, 1]} : vector<4x96xf32> to vector<4x32xf32>
    %394 = vector.extract_strided_slice %382 {offsets = [0, 32], sizes = [4, 32], strides = [1, 1]} : vector<4x96xf32> to vector<4x32xf32>
    %395 = arith.addf %393, %394 : vector<4x32xf32>
    %cst_122 = arith.constant 0.000000e+00 : f32
    %396 = vector.broadcast %cst_122 : f32 to vector<4x32xf32>
    %397 = arith.subf %396, %395 : vector<4x32xf32>
    %398 = math.exp %397 : vector<4x32xf32>
    %cst_123 = arith.constant 1.000000e+00 : f32
    %399 = vector.broadcast %cst_123 : f32 to vector<4x32xf32>
    %400 = arith.addf %399, %398 : vector<4x32xf32>
    %cst_124 = arith.constant 1.000000e+00 : f32
    %401 = vector.broadcast %cst_124 : f32 to vector<4x32xf32>
    %402 = arith.divf %401, %400 : vector<4x32xf32>
    %403 = vector.extract_strided_slice %379 {offsets = [0, 64], sizes = [4, 32], strides = [1, 1]} : vector<4x96xf32> to vector<4x32xf32>
    %404 = vector.extract_strided_slice %382 {offsets = [0, 64], sizes = [4, 32], strides = [1, 1]} : vector<4x96xf32> to vector<4x32xf32>
    %405 = arith.mulf %392, %404 : vector<4x32xf32>
    %406 = arith.addf %403, %405 : vector<4x32xf32>
    %407 = math.tanh %406 : vector<4x32xf32>
    %cst_125 = arith.constant 1.000000e+00 : f32
    %408 = vector.broadcast %cst_125 : f32 to vector<4x32xf32>
    %409 = arith.subf %408, %402 : vector<4x32xf32>
    %410 = arith.mulf %409, %407 : vector<4x32xf32>
    %411 = arith.mulf %402, %371 : vector<4x32xf32>
    %412 = arith.addf %410, %411 : vector<4x32xf32>
    %413 = arith.index_cast %c9_i32 : i32 to index
    %c0_126 = arith.constant 0 : index
    %c0_127 = arith.constant 0 : index
    %414 = vector.load %arg6[%413, %c0_126, %c0_127] : memref<10x4x32xf32, #tpu.memory_space<vmem>>, vector<1x4x32xf32>
    %415 = vector.shape_cast %414 : vector<1x4x32xf32> to vector<4x32xf32>
    %416 = vector.shape_cast %412 : vector<4x32xf32> to vector<1x4x32xf32>
    tpu.vector_store %arg6[%413, %c0_126, %c0_127], %416 {strides = array<i32>} : memref<10x4x32xf32, #tpu.memory_space<vmem>>, vector<1x4x32xf32>,
    %c10_i32 = arith.constant 10 : i32
    %c0_128 = arith.constant 0 : index
    %c0_129 = arith.constant 0 : index
    %417 = vector.load %arg8[%c0_128, %c0_129] : memref<4x32xf32, #tpu.memory_space<vmem>>, vector<4x32xf32>
    tpu.vector_store %arg8[%c0_128, %c0_129], %412 {strides = array<i32>} : memref<4x32xf32, #tpu.memory_space<vmem>>, vector<4x32xf32>,
    %c1_i32_130 = arith.constant 1 : i32
    %418 = arith.cmpi eq, %arg0, %c1_i32_130 : i32
    %419 = arith.extui %418 : i1 to i32
    %c0_i32_131 = arith.constant 0 : i32
    %420 = arith.cmpi ne, %419, %c0_i32_131 : i32
    scf.if %420 {
      %c0_132 = arith.constant 0 : index
      %c0_133 = arith.constant 0 : index
      %421 = vector.load %arg7[%c0_132, %c0_133] : memref<4x32xf32, #tpu.memory_space<vmem>>, vector<4x32xf32>
      tpu.vector_store %arg7[%c0_132, %c0_133], %412 {strides = array<i32>} : memref<4x32xf32, #tpu.memory_space<vmem>>, vector<4x32xf32>,
    } else {
    }
    return
  }
  func.func @transform_0(%arg0: i32) -> (i32, i32, i32) {
    %c0_i32 = arith.constant 0 : i32
    %c0_i32_0 = arith.constant 0 : i32
    %c0_i32_1 = arith.constant 0 : i32
    return %arg0, %c0_i32, %c0_i32_0 : i32, i32, i32
  }
  func.func @transform_1(%arg0: i32) -> (i32, i32) {
    %c0_i32 = arith.constant 0 : i32
    %c0_i32_0 = arith.constant 0 : i32
    %c0_i32_1 = arith.constant 0 : i32
    return %c0_i32, %c0_i32_0 : i32, i32
  }
  func.func @transform_2(%arg0: i32) -> (i32, i32) {
    %c0_i32 = arith.constant 0 : i32
    %c0_i32_0 = arith.constant 0 : i32
    %c0_i32_1 = arith.constant 0 : i32
    return %c0_i32, %c0_i32_0 : i32, i32
  }
  func.func @transform_3(%arg0: i32) -> (i32, i32) {
    %c0_i32 = arith.constant 0 : i32
    %c0_i32_0 = arith.constant 0 : i32
    %c0_i32_1 = arith.constant 0 : i32
    return %c0_i32, %c0_i32_0 : i32, i32
  }
  func.func @transform_4(%arg0: i32) -> (i32, i32) {
    %c0_i32 = arith.constant 0 : i32
    %c0_i32_0 = arith.constant 0 : i32
    %c0_i32_1 = arith.constant 0 : i32
    return %c0_i32, %c0_i32_0 : i32, i32
  }
  func.func @transform_5(%arg0: i32) -> (i32, i32, i32) {
    %c0_i32 = arith.constant 0 : i32
    %c0_i32_0 = arith.constant 0 : i32
    %c0_i32_1 = arith.constant 0 : i32
    return %arg0, %c0_i32, %c0_i32_0 : i32, i32, i32
  }
  func.func @transform_6(%arg0: i32) -> (i32, i32) {
    %c0_i32 = arith.constant 0 : i32
    %c0_i32_0 = arith.constant 0 : i32
    %c0_i32_1 = arith.constant 0 : i32
    return %c0_i32, %c0_i32_0 : i32, i32
  }
}

module attributes {stable_mosaic.version = 11 : i64} {
  func.func @_matmul_bias_kernel(%arg0: i32, %arg1: i32, %arg2: memref<80x32xf32, #tpu.memory_space<vmem>>, %arg3: memref<32x128xf32, #tpu.memory_space<vmem>>, %arg4: memref<1x128xf32, #tpu.memory_space<vmem>>, %arg5: memref<80x128xf32, #tpu.memory_space<vmem>>) attributes {dimension_semantics = [#tpu.dimension_semantics<parallel>, #tpu.dimension_semantics<parallel>], iteration_bounds = array<i64: 1, 1>, scalar_prefetch = 0 : i64, scratch_operands = 0 : i64, tpu.core_type = #tpu.core_type<tc>, window_params = [{transform_indices = @transform_0, window_bounds = array<i64: 80, 32>}, {transform_indices = @transform_1, window_bounds = array<i64: 32, 128>}, {transform_indices = @transform_2, window_bounds = array<i64: 1, 128>}, {transform_indices = @transform_3, window_bounds = array<i64: 80, 128>}]} {
    %c0 = arith.constant 0 : index
    %c0_0 = arith.constant 0 : index
    %0 = vector.load %arg2[%c0, %c0_0] : memref<80x32xf32, #tpu.memory_space<vmem>>, vector<80x32xf32>
    %c0_1 = arith.constant 0 : index
    %c0_2 = arith.constant 0 : index
    %1 = vector.load %arg3[%c0_1, %c0_2] : memref<32x128xf32, #tpu.memory_space<vmem>>, vector<32x128xf32>
    %cst = arith.constant dense<0.000000e+00> : vector<80x128xf32>
    %2 = tpu.matmul %0, %1, %cst {dimension_numbers = #tpu.dot_dimension_numbers<[1], [0], [0], [1], [0, 0, 1, 1], [], []>} : vector<80x32xf32>, vector<32x128xf32>, vector<80x128xf32> -> vector<80x128xf32>
    %c0_3 = arith.constant 0 : index
    %c0_4 = arith.constant 0 : index
    %3 = vector.load %arg4[%c0_3, %c0_4] : memref<1x128xf32, #tpu.memory_space<vmem>>, vector<1x128xf32>
    %4 = vector.broadcast %3 : vector<1x128xf32> to vector<80x128xf32>
    %5 = arith.addf %2, %4 : vector<80x128xf32>
    %c0_5 = arith.constant 0 : index
    %c0_6 = arith.constant 0 : index
    %6 = vector.load %arg5[%c0_5, %c0_6] : memref<80x128xf32, #tpu.memory_space<vmem>>, vector<80x128xf32>
    tpu.vector_store %arg5[%c0_5, %c0_6], %5 {strides = array<i32>} : memref<80x128xf32, #tpu.memory_space<vmem>>, vector<80x128xf32>,
    return
  }
  func.func @transform_0(%arg0: i32, %arg1: i32) -> (i32, i32) {
    %c0_i32 = arith.constant 0 : i32
    %c0_i32_0 = arith.constant 0 : i32
    return %arg0, %c0_i32 : i32, i32
  }
  func.func @transform_1(%arg0: i32, %arg1: i32) -> (i32, i32) {
    %c0_i32 = arith.constant 0 : i32
    %c0_i32_0 = arith.constant 0 : i32
    return %c0_i32, %arg1 : i32, i32
  }
  func.func @transform_2(%arg0: i32, %arg1: i32) -> (i32, i32) {
    %c0_i32 = arith.constant 0 : i32
    %c0_i32_0 = arith.constant 0 : i32
    return %c0_i32, %arg1 : i32, i32
  }
  func.func @transform_3(%arg0: i32, %arg1: i32) -> (i32, i32) {
    %c0_i32 = arith.constant 0 : i32
    return %arg0, %arg1 : i32, i32
  }
}

module attributes {stable_mosaic.version = 11 : i64} {
  func.func @_matmul_bias_kernel(%arg0: i32, %arg1: i32, %arg2: memref<80x32xf32, #tpu.memory_space<vmem>>, %arg3: memref<32x128xf32, #tpu.memory_space<vmem>>, %arg4: memref<1x128xf32, #tpu.memory_space<vmem>>, %arg5: memref<80x128xf32, #tpu.memory_space<vmem>>) attributes {dimension_semantics = [#tpu.dimension_semantics<parallel>, #tpu.dimension_semantics<parallel>], iteration_bounds = array<i64: 1, 1>, scalar_prefetch = 0 : i64, scratch_operands = 0 : i64, tpu.core_type = #tpu.core_type<tc>, window_params = [{transform_indices = @transform_0, window_bounds = array<i64: 80, 32>}, {transform_indices = @transform_1, window_bounds = array<i64: 32, 128>}, {transform_indices = @transform_2, window_bounds = array<i64: 1, 128>}, {transform_indices = @transform_3, window_bounds = array<i64: 80, 128>}]} {
    %c0 = arith.constant 0 : index
    %c0_0 = arith.constant 0 : index
    %0 = vector.load %arg2[%c0, %c0_0] : memref<80x32xf32, #tpu.memory_space<vmem>>, vector<80x32xf32>
    %c0_1 = arith.constant 0 : index
    %c0_2 = arith.constant 0 : index
    %1 = vector.load %arg3[%c0_1, %c0_2] : memref<32x128xf32, #tpu.memory_space<vmem>>, vector<32x128xf32>
    %cst = arith.constant dense<0.000000e+00> : vector<80x128xf32>
    %2 = tpu.matmul %0, %1, %cst {dimension_numbers = #tpu.dot_dimension_numbers<[1], [0], [0], [1], [0, 0, 1, 1], [], []>} : vector<80x32xf32>, vector<32x128xf32>, vector<80x128xf32> -> vector<80x128xf32>
    %c0_3 = arith.constant 0 : index
    %c0_4 = arith.constant 0 : index
    %3 = vector.load %arg4[%c0_3, %c0_4] : memref<1x128xf32, #tpu.memory_space<vmem>>, vector<1x128xf32>
    %4 = vector.broadcast %3 : vector<1x128xf32> to vector<80x128xf32>
    %5 = arith.addf %2, %4 : vector<80x128xf32>
    %c0_5 = arith.constant 0 : index
    %c0_6 = arith.constant 0 : index
    %6 = vector.load %arg5[%c0_5, %c0_6] : memref<80x128xf32, #tpu.memory_space<vmem>>, vector<80x128xf32>
    tpu.vector_store %arg5[%c0_5, %c0_6], %5 {strides = array<i32>} : memref<80x128xf32, #tpu.memory_space<vmem>>, vector<80x128xf32>,
    return
  }
  func.func @transform_0(%arg0: i32, %arg1: i32) -> (i32, i32) {
    %c0_i32 = arith.constant 0 : i32
    %c0_i32_0 = arith.constant 0 : i32
    return %arg0, %c0_i32 : i32, i32
  }
  func.func @transform_1(%arg0: i32, %arg1: i32) -> (i32, i32) {
    %c0_i32 = arith.constant 0 : i32
    %c0_i32_0 = arith.constant 0 : i32
    return %c0_i32, %arg1 : i32, i32
  }
  func.func @transform_2(%arg0: i32, %arg1: i32) -> (i32, i32) {
    %c0_i32 = arith.constant 0 : i32
    %c0_i32_0 = arith.constant 0 : i32
    return %c0_i32, %arg1 : i32, i32
  }
  func.func @transform_3(%arg0: i32, %arg1: i32) -> (i32, i32) {
    %c0_i32 = arith.constant 0 : i32
    return %arg0, %arg1 : i32, i32
  }
}

</mosaic_0001>

<llo_original>
// kernel: seq2seq_decoder_forward.5
$region0: #{seq2seq_decoder_forward.5}
  #allocation0 [shape = 'u32[]', space=smem, size = 0x4, offset = 0x4, fixed_abs, tag = 'smem constant byte address 0x4 - core index']
  #allocation1 [shape = 'u32[144,128]{1,0:T(1,128)}', space=vmem, size = 0x12000, scoped, tag = 'internal scratch']
  %s0 = inlined_call_operand.vmem [shape: f32[80,16], index: 0, kind: input, shape index: {}]
  %s1 = inlined_call_operand.vmem [shape: f32[16,128], index: 1, kind: input, shape index: {}]
  %s2 = inlined_call_operand.vmem [shape: f32[1,128], index: 2, kind: input, shape index: {}]
  %s3 = inlined_call_operand.vmem [shape: f32[80,128], index: 3, kind: output, shape index: {}]
  %s4 = sld [smem:[#allocation0]]
  $region22: #{seq2seq_decoder_forward.5} parent=0
    _
  %s6 = ssub.s32 1, %s4
  %s7 = scalar_select 0, %s6, %s4
  // Predicated region
  $region2: #{seq2seq_decoder_forward.5} parent=0 // pred_check
    _
  $region3: #{seq2seq_decoder_forward.5} parent=0 // pred_check_branch
    %9 = sbr.rel (0) target = $region5
  $region4: #{seq2seq_decoder_forward.5} parent=0 // pred_region
    _
  $region5: #{seq2seq_decoder_forward.5} parent=0 // pred_fallthru
    _
  // Predicated region
  $region6: #{seq2seq_decoder_forward.5} parent=0 // pred_check
    _
  $region7: #{seq2seq_decoder_forward.5} parent=0 // pred_check_branch
    %11 = sbr.rel (0) target = $region9
  $region8: #{seq2seq_decoder_forward.5} parent=0 // pred_region
    _
  $region9: #{seq2seq_decoder_forward.5} parent=0 // pred_fallthru
    _
  // Predicated region
  $region10: #{seq2seq_decoder_forward.5} parent=0 // pred_check
    _
  $region11: #{seq2seq_decoder_forward.5} parent=0 // pred_check_branch
    %13 = sbr.rel (0) target = $region13
  $region12: #{seq2seq_decoder_forward.5} parent=0 // pred_region
    _
  $region13: #{seq2seq_decoder_forward.5} parent=0 // pred_fallthru
    _
  %v14 = vld [vmem:[%s0] sm:$0xff]
  %v15 = vld [vmem:[%s0 + $0x8] sm:$0xff]
  %v16 = vld [vmem:[%s0 + $0x10] sm:$0xff]
  %v17 = vld [vmem:[%s0 + $0x18] sm:$0xff]
  %v18 = vld [vmem:[%s0 + $0x20] sm:$0xff]
  %v19 = vld [vmem:[%s0 + $0x28] sm:$0xff]
  %v20 = vld [vmem:[%s0 + $0x30] sm:$0xff]
  %v21 = vld [vmem:[%s0 + $0x38] sm:$0xff]
  %v22 = vld [vmem:[%s0 + $0x40] sm:$0xff]
  %v23 = vld [vmem:[%s0 + $0x48] sm:$0xff]
  %v24 = vld [vmem:[%s1] sm:$0xff]
  %v25 = vld [vmem:[%s1 + $0x8] sm:$0xff]
  %v26 = vld [vmem:[%s2] sm:$0x1]
  %v28 = vlaneseq
  %v29 = vshrl.u32 %v28, 7
  %v30 = vsub.s32 0, %v29
  %v31 = vrot.slane %v26, %v30
  %vm33 = vcmask 130048
  %v35 = vsel %vm33, %v14, 0
  %v38 = vsel %vm33, %v15, 0
  %v41 = vsel %vm33, %v16, 0
  %v44 = vsel %vm33, %v17, 0
  %v47 = vsel %vm33, %v18, 0
  %v50 = vsel %vm33, %v19, 0
  %v53 = vsel %vm33, %v20, 0
  %v56 = vsel %vm33, %v21, 0
  %v59 = vsel %vm33, %v22, 0
  %v62 = vsel %vm33, %v23, 0
  %64 = vmatprep.subr.mxu0 0.0
  %65 = vmatpush1.msra.mxu0 %v24
  %66 = vmatprep.subr.mxu0 0.0
  %67 = vmatpush1.msra.mxu0 %v25
  %68 = vmatprep.subr.mxu0 0.0
  %69 = vmatpush1.msra.mxu0 0.0
  %70 = vmatprep.subr.mxu0 0.0
  %71 = vmatpush1.msra.mxu0 0.0
  %72 = vmatprep.subr.mxu0 0.0
  %73 = vmatpush1.msra.mxu0 0.0
  %74 = vmatprep.subr.mxu0 0.0
  %75 = vmatpush1.msra.mxu0 0.0
  %76 = vmatprep.subr.mxu0 0.0
  %77 = vmatpush1.msra.mxu0 0.0
  %78 = vmatprep.subr.mxu0 0.0
  %79 = vmatpush1.msra.mxu0 0.0
  %80 = vmatprep.subr.mxu0 0.0
  %81 = vmatpush1.msra.mxu0 0.0
  %82 = vmatprep.subr.mxu0 0.0
  %83 = vmatpush1.msra.mxu0 0.0
  %84 = vmatprep.subr.mxu0 0.0
  %85 = vmatpush1.msra.mxu0 0.0
  %86 = vmatprep.subr.mxu0 0.0
  %87 = vmatpush1.msra.mxu0 0.0
  %88 = vmatprep.subr.mxu0 0.0
  %89 = vmatpush1.msra.mxu0 0.0
  %90 = vmatprep.subr.mxu0 0.0
  %91 = vmatpush1.msra.mxu0 0.0
  %92 = vmatprep.subr.mxu0 0.0
  %93 = vmatpush1.msra.mxu0 0.0
  %94 = vmatprep.subr.mxu0 0.0
  %95 = vmatpush1.msra.mxu0 0.0
  %96 = vmatprep.subr.mxu0 0.0
  %97 = vmatpush1.msra.mxu0 0.0
  %98 = vmatprep.subr.mxu0 0.0
  %99 = vmatpush1.msra.mxu0 0.0
  %100 = vmatprep.subr.mxu0 0.0
  %101 = vmatpush1.msra.mxu0 0.0
  %102 = vmatprep.subr.mxu0 0.0
  %103 = vmatpush1.msra.mxu0 0.0
  %104 = vmatprep.subr.mxu0 0.0
  %105 = vmatpush1.msra.mxu0 0.0
  %106 = vmatprep.subr.mxu0 0.0
  %107 = vmatpush1.msra.mxu0 0.0
  %108 = vmatprep.subr.mxu0 0.0
  %109 = vmatpush1.msra.mxu0 0.0
  %110 = vmatprep.subr.mxu0 0.0
  %111 = vmatpush1.msra.mxu0 0.0
  %112 = vmatprep.subr.mxu0 0.0
  %113 = vmatpush1.msra.mxu0 0.0
  %114 = vmatprep.subr.mxu0 0.0
  %115 = vmatpush1.msra.mxu0 0.0
  %116 = vmatprep.subr.mxu0 0.0
  %117 = vmatpush1.msra.mxu0 0.0
  %118 = vmatprep.subr.mxu0 0.0
  %119 = vmatpush1.msra.mxu0 0.0
  %120 = vmatprep.subr.mxu0 0.0
  %121 = vmatpush1.msra.mxu0 0.0
  %122 = vmatprep.subr.mxu0 0.0
  %123 = vmatpush1.msra.mxu0 0.0
  %124 = vmatprep.subr.mxu0 0.0
  %125 = vmatpush1.msra.mxu0 0.0
  %126 = vmatprep.subr.mxu0 0.0
  %127 = vmatpush1.msra.mxu0 0.0
  %128 = vmatprep.mubr.f32.mxu0 0.0
  %129 = vmatmul.mubr.f32.gmra.mrb[0].mxu0 %v35
  %v130 = vpop.f32.mrb[0].mxu0
  %v131 = vadd.f32 %v31, %v130
  %v132 = vpop.f32.mrb[0].mxu0
  %133 = vmatprep.mubr.f32.mxu0 0.0
  %134 = vmatmul.mubr.f32.gmra.mrb[0].mxu0 %v38
  %v135 = vpop.f32.mrb[0].mxu0
  %v136 = vadd.f32 %v31, %v135
  %v137 = vpop.f32.mrb[0].mxu0
  %138 = vmatprep.mubr.f32.mxu0 0.0
  %139 = vmatmul.mubr.f32.gmra.mrb[0].mxu0 %v41
  %v140 = vpop.f32.mrb[0].mxu0
  %v141 = vadd.f32 %v31, %v140
  %v142 = vpop.f32.mrb[0].mxu0
  %143 = vmatprep.mubr.f32.mxu0 0.0
  %144 = vmatmul.mubr.f32.gmra.mrb[0].mxu0 %v44
  %v145 = vpop.f32.mrb[0].mxu0
  %v146 = vadd.f32 %v31, %v145
  %v147 = vpop.f32.mrb[0].mxu0
  %148 = vmatprep.mubr.f32.mxu0 0.0
  %149 = vmatmul.mubr.f32.gmra.mrb[0].mxu0 %v47
  %v150 = vpop.f32.mrb[0].mxu0
  %v151 = vadd.f32 %v31, %v150
  %v152 = vpop.f32.mrb[0].mxu0
  %153 = vmatprep.mubr.f32.mxu0 0.0
  %154 = vmatmul.mubr.f32.gmra.mrb[0].mxu0 %v50
  %v155 = vpop.f32.mrb[0].mxu0
  %v156 = vadd.f32 %v31, %v155
  %v157 = vpop.f32.mrb[0].mxu0
  %158 = vmatprep.mubr.f32.mxu0 0.0
  %159 = vmatmul.mubr.f32.gmra.mrb[0].mxu0 %v53
  %v160 = vpop.f32.mrb[0].mxu0
  %v161 = vadd.f32 %v31, %v160
  %v162 = vpop.f32.mrb[0].mxu0
  %163 = vmatprep.mubr.f32.mxu0 0.0
  %164 = vmatmul.mubr.f32.gmra.mrb[0].mxu0 %v56
  %v165 = vpop.f32.mrb[0].mxu0
  %v166 = vadd.f32 %v31, %v165
  %v167 = vpop.f32.mrb[0].mxu0
  %168 = vmatprep.mubr.f32.mxu0 0.0
  %169 = vmatmul.mubr.f32.gmra.mrb[0].mxu0 %v59
  %v170 = vpop.f32.mrb[0].mxu0
  %v171 = vadd.f32 %v31, %v170
  %v172 = vpop.f32.mrb[0].mxu0
  %173 = vmatprep.mubr.f32.mxu0 0.0
  %174 = vmatmul.mubr.f32.gmra.mrb[0].mxu0 %v62
  %v175 = vpop.f32.mrb[0].mxu0
  %v176 = vadd.f32 %v31, %v175
  %v177 = vpop.f32.mrb[0].mxu0
  %178 = vdwg.mxu0
  %179 = vst [vmem:[%s3] sm:$0xff] %v131
  %180 = vst [vmem:[%s3 + $0x8] sm:$0xff] %v136
  %181 = vst [vmem:[%s3 + $0x10] sm:$0xff] %v141
  %182 = vst [vmem:[%s3 + $0x18] sm:$0xff] %v146
  %183 = vst [vmem:[%s3 + $0x20] sm:$0xff] %v151
  %184 = vst [vmem:[%s3 + $0x28] sm:$0xff] %v156
  %185 = vst [vmem:[%s3 + $0x30] sm:$0xff] %v161
  %186 = vst [vmem:[%s3 + $0x38] sm:$0xff] %v166
  %187 = vst [vmem:[%s3 + $0x40] sm:$0xff] %v171
  %188 = vst [vmem:[%s3 + $0x48] sm:$0xff] %v176
  // Predicated region
  $region14: #{seq2seq_decoder_forward.5} parent=0 // pred_check
    _
  $region15: #{seq2seq_decoder_forward.5} parent=0 // pred_check_branch
    %190 = sbr.rel (0) target = $region17
  $region16: #{seq2seq_decoder_forward.5} parent=0 // pred_region
    _
  $region17: #{seq2seq_decoder_forward.5} parent=0 // pred_fallthru
    _
  // Predicated region
  $region18: #{seq2seq_decoder_forward.5} parent=0 // pred_check
    _
  $region19: #{seq2seq_decoder_forward.5} parent=0 // pred_check_branch
    %192 = sbr.rel (0) target = $region21
  $region20: #{seq2seq_decoder_forward.5} parent=0 // pred_region
    _
  $region21: #{seq2seq_decoder_forward.5} parent=0 // pred_fallthru
    _

// kernel: seq2seq_decoder_forward.7
$region0: #{seq2seq_decoder_forward.7}
  #allocation0 [shape = 'u32[]', space=smem, size = 0x4, offset = 0x4, fixed_abs, tag = 'smem constant byte address 0x4 - core index']
  #allocation1 [shape = 'u32[144,128]{1,0:T(1,128)}', space=vmem, size = 0x12000, scoped, tag = 'internal scratch']
  %s0 = inlined_call_operand.vmem [shape: f32[80,32], index: 0, kind: input, shape index: {}]
  %s1 = inlined_call_operand.vmem [shape: f32[32,128], index: 1, kind: input, shape index: {}]
  %s2 = inlined_call_operand.vmem [shape: f32[1,128], index: 2, kind: input, shape index: {}]
  %s3 = inlined_call_operand.vmem [shape: f32[80,128], index: 3, kind: output, shape index: {}]
  %s4 = sld [smem:[#allocation0]]
  $region22: #{seq2seq_decoder_forward.7} parent=0
    _
  %s6 = ssub.s32 1, %s4
  %s7 = scalar_select 0, %s6, %s4
  // Predicated region
  $region2: #{seq2seq_decoder_forward.7} parent=0 // pred_check
    _
  $region3: #{seq2seq_decoder_forward.7} parent=0 // pred_check_branch
    %9 = sbr.rel (0) target = $region5
  $region4: #{seq2seq_decoder_forward.7} parent=0 // pred_region
    _
  $region5: #{seq2seq_decoder_forward.7} parent=0 // pred_fallthru
    _
  // Predicated region
  $region6: #{seq2seq_decoder_forward.7} parent=0 // pred_check
    _
  $region7: #{seq2seq_decoder_forward.7} parent=0 // pred_check_branch
    %11 = sbr.rel (0) target = $region9
  $region8: #{seq2seq_decoder_forward.7} parent=0 // pred_region
    _
  $region9: #{seq2seq_decoder_forward.7} parent=0 // pred_fallthru
    _
  // Predicated region
  $region10: #{seq2seq_decoder_forward.7} parent=0 // pred_check
    _
  $region11: #{seq2seq_decoder_forward.7} parent=0 // pred_check_branch
    %13 = sbr.rel (0) target = $region13
  $region12: #{seq2seq_decoder_forward.7} parent=0 // pred_region
    _
  $region13: #{seq2seq_decoder_forward.7} parent=0 // pred_fallthru
    _
  %v14 = vld [vmem:[%s0] sm:$0xff]
  %v15 = vld [vmem:[%s0 + $0x8] sm:$0xff]
  %v16 = vld [vmem:[%s0 + $0x10] sm:$0xff]
  %v17 = vld [vmem:[%s0 + $0x18] sm:$0xff]
  %v18 = vld [vmem:[%s0 + $0x20] sm:$0xff]
  %v19 = vld [vmem:[%s0 + $0x28] sm:$0xff]
  %v20 = vld [vmem:[%s0 + $0x30] sm:$0xff]
  %v21 = vld [vmem:[%s0 + $0x38] sm:$0xff]
  %v22 = vld [vmem:[%s0 + $0x40] sm:$0xff]
  %v23 = vld [vmem:[%s0 + $0x48] sm:$0xff]
  %v24 = vld [vmem:[%s1] sm:$0xff]
  %v25 = vld [vmem:[%s1 + $0x8] sm:$0xff]
  %v26 = vld [vmem:[%s1 + $0x10] sm:$0xff]
  %v27 = vld [vmem:[%s1 + $0x18] sm:$0xff]
  %v28 = vld [vmem:[%s2] sm:$0x1]
  %v30 = vlaneseq
  %v31 = vshrl.u32 %v30, 7
  %v32 = vsub.s32 0, %v31
  %v33 = vrot.slane %v28, %v32
  %vm35 = vcmask 261120
  %v37 = vsel %vm35, %v14, 0
  %v40 = vsel %vm35, %v15, 0
  %v43 = vsel %vm35, %v16, 0
  %v46 = vsel %vm35, %v17, 0
  %v49 = vsel %vm35, %v18, 0
  %v52 = vsel %vm35, %v19, 0
  %v55 = vsel %vm35, %v20, 0
  %v58 = vsel %vm35, %v21, 0
  %v61 = vsel %vm35, %v22, 0
  %v64 = vsel %vm35, %v23, 0
  %66 = vmatprep.subr.mxu0 0.0
  %67 = vmatpush1.msra.mxu0 %v24
  %68 = vmatprep.subr.mxu0 0.0
  %69 = vmatpush1.msra.mxu0 %v25
  %70 = vmatprep.subr.mxu0 0.0
  %71 = vmatpush1.msra.mxu0 %v26
  %72 = vmatprep.subr.mxu0 0.0
  %73 = vmatpush1.msra.mxu0 %v27
  %74 = vmatprep.subr.mxu0 0.0
  %75 = vmatpush1.msra.mxu0 0.0
  %76 = vmatprep.subr.mxu0 0.0
  %77 = vmatpush1.msra.mxu0 0.0
  %78 = vmatprep.subr.mxu0 0.0
  %79 = vmatpush1.msra.mxu0 0.0
  %80 = vmatprep.subr.mxu0 0.0
  %81 = vmatpush1.msra.mxu0 0.0
  %82 = vmatprep.subr.mxu0 0.0
  %83 = vmatpush1.msra.mxu0 0.0
  %84 = vmatprep.subr.mxu0 0.0
  %85 = vmatpush1.msra.mxu0 0.0
  %86 = vmatprep.subr.mxu0 0.0
  %87 = vmatpush1.msra.mxu0 0.0
  %88 = vmatprep.subr.mxu0 0.0
  %89 = vmatpush1.msra.mxu0 0.0
  %90 = vmatprep.subr.mxu0 0.0
  %91 = vmatpush1.msra.mxu0 0.0
  %92 = vmatprep.subr.mxu0 0.0
  %93 = vmatpush1.msra.mxu0 0.0
  %94 = vmatprep.subr.mxu0 0.0
  %95 = vmatpush1.msra.mxu0 0.0
  %96 = vmatprep.subr.mxu0 0.0
  %97 = vmatpush1.msra.mxu0 0.0
  %98 = vmatprep.subr.mxu0 0.0
  %99 = vmatpush1.msra.mxu0 0.0
  %100 = vmatprep.subr.mxu0 0.0
  %101 = vmatpush1.msra.mxu0 0.0
  %102 = vmatprep.subr.mxu0 0.0
  %103 = vmatpush1.msra.mxu0 0.0
  %104 = vmatprep.subr.mxu0 0.0
  %105 = vmatpush1.msra.mxu0 0.0
  %106 = vmatprep.subr.mxu0 0.0
  %107 = vmatpush1.msra.mxu0 0.0
  %108 = vmatprep.subr.mxu0 0.0
  %109 = vmatpush1.msra.mxu0 0.0
  %110 = vmatprep.subr.mxu0 0.0
  %111 = vmatpush1.msra.mxu0 0.0
  %112 = vmatprep.subr.mxu0 0.0
  %113 = vmatpush1.msra.mxu0 0.0
  %114 = vmatprep.subr.mxu0 0.0
  %115 = vmatpush1.msra.mxu0 0.0
  %116 = vmatprep.subr.mxu0 0.0
  %117 = vmatpush1.msra.mxu0 0.0
  %118 = vmatprep.subr.mxu0 0.0
  %119 = vmatpush1.msra.mxu0 0.0
  %120 = vmatprep.subr.mxu0 0.0
  %121 = vmatpush1.msra.mxu0 0.0
  %122 = vmatprep.subr.mxu0 0.0
  %123 = vmatpush1.msra.mxu0 0.0
  %124 = vmatprep.subr.mxu0 0.0
  %125 = vmatpush1.msra.mxu0 0.0
  %126 = vmatprep.subr.mxu0 0.0
  %127 = vmatpush1.msra.mxu0 0.0
  %128 = vmatprep.subr.mxu0 0.0
  %129 = vmatpush1.msra.mxu0 0.0
  %130 = vmatprep.mubr.f32.mxu0 0.0
  %131 = vmatmul.mubr.f32.gmra.mrb[0].mxu0 %v37
  %v132 = vpop.f32.mrb[0].mxu0
  %v133 = vadd.f32 %v33, %v132
  %v134 = vpop.f32.mrb[0].mxu0
  %135 = vmatprep.mubr.f32.mxu0 0.0
  %136 = vmatmul.mubr.f32.gmra.mrb[0].mxu0 %v40
  %v137 = vpop.f32.mrb[0].mxu0
  %v138 = vadd.f32 %v33, %v137
  %v139 = vpop.f32.mrb[0].mxu0
  %140 = vmatprep.mubr.f32.mxu0 0.0
  %141 = vmatmul.mubr.f32.gmra.mrb[0].mxu0 %v43
  %v142 = vpop.f32.mrb[0].mxu0
  %v143 = vadd.f32 %v33, %v142
  %v144 = vpop.f32.mrb[0].mxu0
  %145 = vmatprep.mubr.f32.mxu0 0.0
  %146 = vmatmul.mubr.f32.gmra.mrb[0].mxu0 %v46
  %v147 = vpop.f32.mrb[0].mxu0
  %v148 = vadd.f32 %v33, %v147
  %v149 = vpop.f32.mrb[0].mxu0
  %150 = vmatprep.mubr.f32.mxu0 0.0
  %151 = vmatmul.mubr.f32.gmra.mrb[0].mxu0 %v49
  %v152 = vpop.f32.mrb[0].mxu0
  %v153 = vadd.f32 %v33, %v152
  %v154 = vpop.f32.mrb[0].mxu0
  %155 = vmatprep.mubr.f32.mxu0 0.0
  %156 = vmatmul.mubr.f32.gmra.mrb[0].mxu0 %v52
  %v157 = vpop.f32.mrb[0].mxu0
  %v158 = vadd.f32 %v33, %v157
  %v159 = vpop.f32.mrb[0].mxu0
  %160 = vmatprep.mubr.f32.mxu0 0.0
  %161 = vmatmul.mubr.f32.gmra.mrb[0].mxu0 %v55
  %v162 = vpop.f32.mrb[0].mxu0
  %v163 = vadd.f32 %v33, %v162
  %v164 = vpop.f32.mrb[0].mxu0
  %165 = vmatprep.mubr.f32.mxu0 0.0
  %166 = vmatmul.mubr.f32.gmra.mrb[0].mxu0 %v58
  %v167 = vpop.f32.mrb[0].mxu0
  %v168 = vadd.f32 %v33, %v167
  %v169 = vpop.f32.mrb[0].mxu0
  %170 = vmatprep.mubr.f32.mxu0 0.0
  %171 = vmatmul.mubr.f32.gmra.mrb[0].mxu0 %v61
  %v172 = vpop.f32.mrb[0].mxu0
  %v173 = vadd.f32 %v33, %v172
  %v174 = vpop.f32.mrb[0].mxu0
  %175 = vmatprep.mubr.f32.mxu0 0.0
  %176 = vmatmul.mubr.f32.gmra.mrb[0].mxu0 %v64
  %v177 = vpop.f32.mrb[0].mxu0
  %v178 = vadd.f32 %v33, %v177
  %v179 = vpop.f32.mrb[0].mxu0
  %180 = vdwg.mxu0
  %181 = vst [vmem:[%s3] sm:$0xff] %v133
  %182 = vst [vmem:[%s3 + $0x8] sm:$0xff] %v138
  %183 = vst [vmem:[%s3 + $0x10] sm:$0xff] %v143
  %184 = vst [vmem:[%s3 + $0x18] sm:$0xff] %v148
  %185 = vst [vmem:[%s3 + $0x20] sm:$0xff] %v153
  %186 = vst [vmem:[%s3 + $0x28] sm:$0xff] %v158
  %187 = vst [vmem:[%s3 + $0x30] sm:$0xff] %v163
  %188 = vst [vmem:[%s3 + $0x38] sm:$0xff] %v168
  %189 = vst [vmem:[%s3 + $0x40] sm:$0xff] %v173
  %190 = vst [vmem:[%s3 + $0x48] sm:$0xff] %v178
  // Predicated region
  $region14: #{seq2seq_decoder_forward.7} parent=0 // pred_check
    _
  $region15: #{seq2seq_decoder_forward.7} parent=0 // pred_check_branch
    %192 = sbr.rel (0) target = $region17
  $region16: #{seq2seq_decoder_forward.7} parent=0 // pred_region
    _
  $region17: #{seq2seq_decoder_forward.7} parent=0 // pred_fallthru
    _
  // Predicated region
  $region18: #{seq2seq_decoder_forward.7} parent=0 // pred_check
    _
  $region19: #{seq2seq_decoder_forward.7} parent=0 // pred_check_branch
    %194 = sbr.rel (0) target = $region21
  $region20: #{seq2seq_decoder_forward.7} parent=0 // pred_region
    _
  $region21: #{seq2seq_decoder_forward.7} parent=0 // pred_fallthru
    _

// kernel: seq2seq_decoder_forward.6
$region0: #{seq2seq_decoder_forward.6}
  #allocation0 [shape = 'u32[]', space=smem, size = 0x4, offset = 0x4, fixed_abs, tag = 'smem constant byte address 0x4 - core index']
  #allocation1 [shape = 'u32[144,128]{1,0:T(1,128)}', space=vmem, size = 0x12000, scoped, tag = 'internal scratch']
  #allocation2 [shape = 'f32[4,32]{1,0:T(4,128)}', space=vmem, size = 0x800, scoped, tag = 'scratch operand']
  %s0 = inlined_call_operand.vmem [shape: f32[20,4,96], index: 0, kind: input, shape index: {}]
  %s1 = inlined_call_operand.vmem [shape: f32[32,96], index: 1, kind: input, shape index: {}]
  %s2 = inlined_call_operand.vmem [shape: f32[4,96], index: 2, kind: input, shape index: {}]
  %s3 = inlined_call_operand.vmem [shape: f32[1,96], index: 3, kind: input, shape index: {}]
  %s4 = inlined_call_operand.vmem [shape: f32[4,32], index: 4, kind: input, shape index: {}]
  %s5 = inlined_call_operand.vmem [shape: f32[20,4,32], index: 5, kind: output, shape index: {0}]
  %s6 = inlined_call_operand.vmem [shape: f32[4,32], index: 6, kind: output, shape index: {1}]
  %7 = xla_tuple %s5, %s6
  %s8 = sld [smem:[#allocation0]]
  $region69: #{seq2seq_decoder_forward.6} parent=0
    _
  %s10 = ssub.s32 1, %s8
  %s11 = scalar_select 0, %s10, %s8
  loop: start=0, step=1, limit=4
  $region2: #{seq2seq_decoder_forward.6} parent=0 // loop_pre_header
    _
  $region3: #{seq2seq_decoder_forward.6} parent=0 // loop_header
    %s13 = sphi 0, %s17
    %p14 = scmp.ge.s32.totalorder %s13, 4
    %s23 = sphi 0, %s25
    %s26 = sphi 0, %s23
    %s27 = sphi 0, %s26
    %s43 = sphi 0, %s27
    %s47 = sphi 0, %s47
    %s49 = sphi 0, %s47
    %s50 = sphi 0, %s49
    %s64 = sphi 0, %s50
    %s68 = sphi 0, %s68
    %s70 = sphi 0, %s68
    %s71 = sphi 0, %s70
    %s85 = sphi 0, %s71
    %s89 = sphi 0, %s89
    %s91 = sphi 0, %s89
    %s92 = sphi 0, %s91
    %s106 = sphi 0, %s92
    %s110 = sphi 0, %s110
    %s112 = sphi 0, %s110
    %s113 = sphi 0, %s112
    %s127 = sphi 0, %s113
    %s133 = sphi 0, %s135
    %s136 = sphi 0, %s133
    %s137 = sphi 0, %s136
    %s153 = sphi 0, %s137
    %s157 = sphi 0, %s157
    %s159 = sphi 0, %s157
    %s160 = sphi 0, %s159
    %s174 = sphi 0, %s160
  $region4: #{seq2seq_decoder_forward.6} parent=0 // loop_header_branch
    %16 = sbr.rel (%p14) target = $region8
  $region5: #{seq2seq_decoder_forward.6} parent=0 // loop_body
    %s18 = ssub.s32 %s13, 1
    %s19 = ssub.s32 %s13, 2
    %s20 = sadd.s32 %s13, 1
    %s21 = ssub.s32 %s13, %s20
    %p22 = scmp.eq.s32.totalorder %s21, 0
    %s24 = sadd.s32 %s23, 1
    %s25 = scalar_select %p22, %s23, %s24
    %p28 = pneg %p22
    %p29 = scmp.eq.s32.totalorder %s13, 1
    %p30 = por %p28, %p29
    %p31 = scmp.ne.s32.totalorder %s23, %s26
    %p32 = scmp.eq.s32.totalorder %s13, 0
    %p33 = por %p31, %p32
    %p34 = scmp.ne.s32.totalorder %s23, %s26
    %p35 = scmp.eq.s32.totalorder %s18, 1
    %p36 = por %p34, %p35
    %p37 = scmp.ne.s32.totalorder %s26, %s27
    %p38 = scmp.eq.s32.totalorder %s18, 0
    %p39 = por %p37, %p38
    %p40 = scmp.ne.s32.totalorder %s26, %s27
    %p41 = scmp.eq.s32.totalorder %s19, 1
    %p42 = por %p40, %p41
    %p44 = scmp.ne.s32.totalorder %s27, %s43
    %p45 = scmp.eq.s32.totalorder %s19, 0
    %p46 = por %p44, %p45
    %s48 = sadd.s32 %s47, 1
    %p51 = scmp.eq.s32.totalorder %s13, 1
    %p52 = scmp.ne.s32.totalorder %s47, %s49
    %p53 = scmp.eq.s32.totalorder %s13, 0
    %p54 = por %p52, %p53
    %p55 = scmp.ne.s32.totalorder %s47, %s49
    %p56 = scmp.eq.s32.totalorder %s18, 1
    %p57 = por %p55, %p56
    %p58 = scmp.ne.s32.totalorder %s49, %s50
    %p59 = scmp.eq.s32.totalorder %s18, 0
    %p60 = por %p58, %p59
    %p61 = scmp.ne.s32.totalorder %s49, %s50
    %p62 = scmp.eq.s32.totalorder %s19, 1
    %p63 = por %p61, %p62
    %p65 = scmp.ne.s32.totalorder %s50, %s64
    %p66 = scmp.eq.s32.totalorder %s19, 0
    %p67 = por %p65, %p66
    %s69 = sadd.s32 %s68, 1
    %p72 = scmp.eq.s32.totalorder %s13, 1
    %p73 = scmp.ne.s32.totalorder %s68, %s70
    %p74 = scmp.eq.s32.totalorder %s13, 0
    %p75 = por %p73, %p74
    %p76 = scmp.ne.s32.totalorder %s68, %s70
    %p77 = scmp.eq.s32.totalorder %s18, 1
    %p78 = por %p76, %p77
    %p79 = scmp.ne.s32.totalorder %s70, %s71
    %p80 = scmp.eq.s32.totalorder %s18, 0
    %p81 = por %p79, %p80
    %p82 = scmp.ne.s32.totalorder %s70, %s71
    %p83 = scmp.eq.s32.totalorder %s19, 1
    %p84 = por %p82, %p83
    %p86 = scmp.ne.s32.totalorder %s71, %s85
    %p87 = scmp.eq.s32.totalorder %s19, 0
    %p88 = por %p86, %p87
    %s90 = sadd.s32 %s89, 1
    %p93 = scmp.eq.s32.totalorder %s13, 1
    %p94 = scmp.ne.s32.totalorder %s89, %s91
    %p95 = scmp.eq.s32.totalorder %s13, 0
    %p96 = por %p94, %p95
    %p97 = scmp.ne.s32.totalorder %s89, %s91
    %p98 = scmp.eq.s32.totalorder %s18, 1
    %p99 = por %p97, %p98
    %p100 = scmp.ne.s32.totalorder %s91, %s92
    %p101 = scmp.eq.s32.totalorder %s18, 0
    %p102 = por %p100, %p101
    %p103 = scmp.ne.s32.totalorder %s91, %s92
    %p104 = scmp.eq.s32.totalorder %s19, 1
    %p105 = por %p103, %p104
    %p107 = scmp.ne.s32.totalorder %s92, %s106
    %p108 = scmp.eq.s32.totalorder %s19, 0
    %p109 = por %p107, %p108
    %s111 = sadd.s32 %s110, 1
    %p114 = scmp.eq.s32.totalorder %s13, 1
    %p115 = scmp.ne.s32.totalorder %s110, %s112
    %p116 = scmp.eq.s32.totalorder %s13, 0
    %p117 = por %p115, %p116
    %p118 = scmp.ne.s32.totalorder %s110, %s112
    %p119 = scmp.eq.s32.totalorder %s18, 1
    %p120 = por %p118, %p119
    %p121 = scmp.ne.s32.totalorder %s112, %s113
    %p122 = scmp.eq.s32.totalorder %s18, 0
    %p123 = por %p121, %p122
    %p124 = scmp.ne.s32.totalorder %s112, %s113
    %p125 = scmp.eq.s32.totalorder %s19, 1
    %p126 = por %p124, %p125
    %p128 = scmp.ne.s32.totalorder %s113, %s127
    %p129 = scmp.eq.s32.totalorder %s19, 0
    %p130 = por %p128, %p129
    %s131 = ssub.s32 %s13, %s20
    %p132 = scmp.eq.s32.totalorder %s131, 0
    %s134 = sadd.s32 %s133, 1
    %s135 = scalar_select %p132, %s133, %s134
    %p138 = pneg %p132
    %p139 = scmp.eq.s32.totalorder %s13, 1
    %p140 = por %p138, %p139
    %p141 = scmp.ne.s32.totalorder %s133, %s136
    %p142 = scmp.eq.s32.totalorder %s13, 0
    %p143 = por %p141, %p142
    %p144 = scmp.ne.s32.totalorder %s133, %s136
    %p145 = scmp.eq.s32.totalorder %s18, 1
    %p146 = por %p144, %p145
    %p147 = scmp.ne.s32.totalorder %s136, %s137
    %p148 = scmp.eq.s32.totalorder %s18, 0
    %p149 = por %p147, %p148
    %p150 = scmp.ne.s32.totalorder %s136, %s137
    %p151 = scmp.eq.s32.totalorder %s19, 1
    %p152 = por %p150, %p151
    %p154 = scmp.ne.s32.totalorder %s137, %s153
    %p155 = scmp.eq.s32.totalorder %s19, 0
    %p156 = por %p154, %p155
    %s158 = sadd.s32 %s157, 1
    %p161 = scmp.eq.s32.totalorder %s13, 1
    %p162 = scmp.ne.s32.totalorder %s157, %s159
    %p163 = scmp.eq.s32.totalorder %s13, 0
    %p164 = por %p162, %p163
    %p165 = scmp.ne.s32.totalorder %s157, %s159
    %p166 = scmp.eq.s32.totalorder %s18, 1
    %p167 = por %p165, %p166
    %p168 = scmp.ne.s32.totalorder %s159, %s160
    %p169 = scmp.eq.s32.totalorder %s18, 0
    %p170 = por %p168, %p169
    %p171 = scmp.ne.s32.totalorder %s159, %s160
    %p172 = scmp.eq.s32.totalorder %s19, 1
    %p173 = por %p171, %p172
    %p175 = scmp.ne.s32.totalorder %s160, %s174
    %p176 = scmp.eq.s32.totalorder %s19, 0
    %p177 = por %p175, %p176
    %p178 = scmp.le.s32.totalorder 1, %s13
    %p179 = scmp.lt.s32.totalorder %s13, 3
    %p180 = pnand %p178, %p179
    %p181 = pneg %p180
    // Predicated region
    $region9: #{seq2seq_decoder_forward.6} parent=5 // pred_check
      _
    $region10: #{seq2seq_decoder_forward.6} parent=5 // pred_check_branch
      %183 = sbr.rel (%p180) target = $region12
    $region11: #{seq2seq_decoder_forward.6} parent=5 // pred_region
      %s184 = ssub.s32 %s13, 1
      // Predicated region
      $region13: #{seq2seq_decoder_forward.6} parent=11 // pred_check
        %p185 = pneg %p60
      $region14: #{seq2seq_decoder_forward.6} parent=11 // pred_check_branch
        %187 = sbr.rel (%p185) target = $region16
      $region15: #{seq2seq_decoder_forward.6} parent=11 // pred_region
        _
      $region16: #{seq2seq_decoder_forward.6} parent=11 // pred_fallthru
        _
      // Predicated region
      $region17: #{seq2seq_decoder_forward.6} parent=11 // pred_check
        %p188 = pneg %p81
      $region18: #{seq2seq_decoder_forward.6} parent=11 // pred_check_branch
        %190 = sbr.rel (%p188) target = $region20
      $region19: #{seq2seq_decoder_forward.6} parent=11 // pred_region
        _
      $region20: #{seq2seq_decoder_forward.6} parent=11 // pred_fallthru
        _
      // Predicated region
      $region21: #{seq2seq_decoder_forward.6} parent=11 // pred_check
        %p191 = pneg %p102
      $region22: #{seq2seq_decoder_forward.6} parent=11 // pred_check_branch
        %193 = sbr.rel (%p191) target = $region24
      $region23: #{seq2seq_decoder_forward.6} parent=11 // pred_region
        _
      $region24: #{seq2seq_decoder_forward.6} parent=11 // pred_fallthru
        _
      // Predicated region
      $region25: #{seq2seq_decoder_forward.6} parent=11 // pred_check
        %p194 = pneg %p123
      $region26: #{seq2seq_decoder_forward.6} parent=11 // pred_check_branch
        %196 = sbr.rel (%p194) target = $region28
      $region27: #{seq2seq_decoder_forward.6} parent=11 // pred_region
        _
      $region28: #{seq2seq_decoder_forward.6} parent=11 // pred_fallthru
        _
    $region12: #{seq2seq_decoder_forward.6} parent=5 // pred_fallthru
      _
    %p197 = scmp.lt.s32.totalorder %s13, 2
    // Predicated region
    $region29: #{seq2seq_decoder_forward.6} parent=5 // pred_check
      %p198 = pneg %p197
    $region30: #{seq2seq_decoder_forward.6} parent=5 // pred_check_branch
      %200 = sbr.rel (%p198) target = $region32
    $region31: #{seq2seq_decoder_forward.6} parent=5 // pred_region
      // Predicated region
      $region33: #{seq2seq_decoder_forward.6} parent=31 // pred_check
        %p201 = pneg %p33
      $region34: #{seq2seq_decoder_forward.6} parent=31 // pred_check_branch
        %203 = sbr.rel (%p201) target = $region36
      $region35: #{seq2seq_decoder_forward.6} parent=31 // pred_region
        %s204 = smul.u32 10, %s13
        %p205 = scmp.lt.s32.totalorder %s204, 19
        %s206 = scalar_select %p205, %s204, 19
        %s207 = smul.addr %s206, 4
        %s208 = scalar_lea.vmem %s0, %s207
        %s209 = smul.u32 10, %s13
      $region36: #{seq2seq_decoder_forward.6} parent=31 // pred_fallthru
        _
    $region32: #{seq2seq_decoder_forward.6} parent=5 // pred_fallthru
      _
    %p210 = scmp.le.s32.totalorder 1, %s13
    %p211 = scmp.lt.s32.totalorder %s13, 3
    %p212 = pnand %p210, %p211
    %p213 = pneg %p212
    // Predicated region
    $region37: #{seq2seq_decoder_forward.6} parent=5 // pred_check
      _
    $region38: #{seq2seq_decoder_forward.6} parent=5 // pred_check_branch
      %215 = sbr.rel (%p212) target = $region40
    $region39: #{seq2seq_decoder_forward.6} parent=5 // pred_region
      %s216 = ssub.s32 %s13, 1
      %s217 = smul.u32 10, %s18
      %p218 = scmp.lt.s32.totalorder %s217, 19
      %s219 = scalar_select %p218, %s217, 19
      %s220 = smul.addr %s219, 4
      %s221 = scalar_lea.vmem %s0, %s220
      %p222 = pneg %p39
      %p223 = pneg %p36
      %p224 = pneg %p60
      %p225 = pneg %p57
      %p226 = pneg %p81
      %p227 = pneg %p78
      %p228 = pneg %p102
      %p229 = pneg %p99
      %p230 = pneg %p123
      %p231 = pneg %p120
      %p232 = pneg %p149
      %p233 = pneg %p146
      %s234 = smul.u32 10, %s18
      %p235 = scmp.lt.s32.totalorder %s234, 19
      %s236 = scalar_select %p235, %s234, 19
      %s237 = smul.addr %s236, 4
      %s238 = scalar_lea.vmem %s5, %s237
      %p239 = pneg %p170
      %p240 = pneg %p167
      %s241 = smul.u32 10, %s18
      %p242 = scmp.lt.s32.totalorder %s241, 19
      %s243 = scalar_select %p242, %s241, 19
      %s244 = smul.addr %s243, 4
      %s245 = scalar_lea.vmem %s0, %s244
      %s246 = smul.u32 10, %s18
      %s247 = smul.u32 10, %s18
      %p248 = scmp.lt.s32.totalorder %s247, 19
      %s249 = scalar_select %p248, %s247, 19
      %s250 = smul.addr %s249, 4
      %s251 = scalar_lea.vmem %s5, %s250
      %s252 = smul.u32 10, %s18
      %p253 = scmp.eq.s32.totalorder %s18, 0
      // Predicated region
      $region41: #{seq2seq_decoder_forward.6} parent=39 // pred_check
        %p254 = pneg %p253
      $region42: #{seq2seq_decoder_forward.6} parent=39 // pred_check_branch
        %256 = sbr.rel (%p254) target = $region44
      $region43: #{seq2seq_decoder_forward.6} parent=39 // pred_region
        %v257 = vld [vmem:[%s4] sm:$0xf]
        %vm258 = vcmask 257024
        %259 = vst.msk [vmem:[#allocation2] sm:$0xf] %vm258, %v257
      $region44: #{seq2seq_decoder_forward.6} parent=39 // pred_fallthru
        _
      %v260 = vld [vmem:[%s1] sm:$0xff]
      %v261 = vld [vmem:[%s1 + $0x8] sm:$0xff]
      %v262 = vld [vmem:[%s1 + $0x10] sm:$0xff]
      %v263 = vld [vmem:[%s1 + $0x18] sm:$0xff]
      %v264 = vld [vmem:[%s2] sm:$0xf]
      %v265 = vld [vmem:[%s3] sm:$0x1]
      %v266 = vld [vmem:[#allocation2] sm:$0xf]
      %v267 = vld [vmem:[%s245] sm:$0xf]
      %v268 = vadd.f32 %v267, %v264
      %v270 = vlaneseq
      %v271 = vshrl.u32 %v270, 7
      %v272 = vsub.s32 0, %v271
      %v273 = vrot.slane %v265, %v272
      %vm275 = vcmask 261120
      %v277 = vsel %vm275, %v266, 0
      %279 = vmatprep.subr.mxu0 0.0
      %280 = vmatpush1.msra.mxu0 %v260
      %281 = vmatprep.subr.mxu0 0.0
      %282 = vmatpush1.msra.mxu0 %v261
      %283 = vmatprep.subr.mxu0 0.0
      %284 = vmatpush1.msra.mxu0 %v262
      %285 = vmatprep.subr.mxu0 0.0
      %286 = vmatpush1.msra.mxu0 %v263
      %287 = vmatprep.subr.mxu0 0.0
      %288 = vmatpush1.msra.mxu0 0.0
      %289 = vmatprep.subr.mxu0 0.0
      %290 = vmatpush1.msra.mxu0 0.0
      %291 = vmatprep.subr.mxu0 0.0
      %292 = vmatpush1.msra.mxu0 0.0
      %293 = vmatprep.subr.mxu0 0.0
      %294 = vmatpush1.msra.mxu0 0.0
      %295 = vmatprep.subr.mxu0 0.0
      %296 = vmatpush1.msra.mxu0 0.0
      %297 = vmatprep.subr.mxu0 0.0
      %298 = vmatpush1.msra.mxu0 0.0
      %299 = vmatprep.subr.mxu0 0.0
      %300 = vmatpush1.msra.mxu0 0.0
      %301 = vmatprep.subr.mxu0 0.0
      %302 = vmatpush1.msra.mxu0 0.0
      %303 = vmatprep.subr.mxu0 0.0
      %304 = vmatpush1.msra.mxu0 0.0
      %305 = vmatprep.subr.mxu0 0.0
      %306 = vmatpush1.msra.mxu0 0.0
      %307 = vmatprep.subr.mxu0 0.0
      %308 = vmatpush1.msra.mxu0 0.0
      %309 = vmatprep.subr.mxu0 0.0
      %310 = vmatpush1.msra.mxu0 0.0
      %311 = vmatprep.subr.mxu0 0.0
      %312 = vmatpush1.msra.mxu0 0.0
      %313 = vmatprep.subr.mxu0 0.0
      %314 = vmatpush1.msra.mxu0 0.0
      %315 = vmatprep.subr.mxu0 0.0
      %316 = vmatpush1.msra.mxu0 0.0
      %317 = vmatprep.subr.mxu0 0.0
      %318 = vmatpush1.msra.mxu0 0.0
      %319 = vmatprep.subr.mxu0 0.0
      %320 = vmatpush1.msra.mxu0 0.0
      %321 = vmatprep.subr.mxu0 0.0
      %322 = vmatpush1.msra.mxu0 0.0
      %323 = vmatprep.subr.mxu0 0.0
      %324 = vmatpush1.msra.mxu0 0.0
      %325 = vmatprep.subr.mxu0 0.0
      %326 = vmatpush1.msra.mxu0 0.0
      %327 = vmatprep.subr.mxu0 0.0
      %328 = vmatpush1.msra.mxu0 0.0
      %329 = vmatprep.subr.mxu0 0.0
      %330 = vmatpush1.msra.mxu0 0.0
      %331 = vmatprep.subr.mxu0 0.0
      %332 = vmatpush1.msra.mxu0 0.0
      %333 = vmatprep.subr.mxu0 0.0
      %334 = vmatpush1.msra.mxu0 0.0
      %335 = vmatprep.subr.mxu0 0.0
      %336 = vmatpush1.msra.mxu0 0.0
      %337 = vmatprep.subr.mxu0 0.0
      %338 = vmatpush1.msra.mxu0 0.0
      %339 = vmatprep.subr.mxu0 0.0
      %340 = vmatpush1.msra.mxu0 0.0
      %341 = vmatprep.subr.mxu0 0.0
      %342 = vmatpush1.msra.mxu0 0.0
      %343 = vmatprep.mubr.f32.mxu0 0.0
      %344 = vmatmul.mubr.f32.gmra.mrb[0].mxu0 %v277
      %v345 = vpop.f32.mrb[0].mxu0
      %v346 = vadd.f32 %v273, %v345
      %v347 = vpop.f32.mrb[0].mxu0
      %348 = vdwg.mxu0
      %v349 = vadd.f32 %v268, %v346
      %v350 = vsub.f32 0.0, %v349
      %v351 = vmul.f32 %v350, 1.442695
      %v352 = vpow.pop %v351
      %v353 = vadd.f32 %v352, 1.0
      %v354 = vrcp.pop %v353
      %v355 = vmul.f32 1.0, %v354
      %357 = vrot.lane.b32.xlu0 %v346, 64
      %v358 = vpop.permute.xlu0 %357
      %v360 = vmul.f32 %v355, %v358
      %362 = vrot.lane.b32.xlu0 %v360, 64
      %v363 = vpop.permute.xlu0 %362
      %v365 = vadd.f32 %v268, %v363
      %v366 = vtanh.pop %v365
      %v367 = vsub.f32 1.0, %v355
      %369 = vrot.lane.b32.xlu0 %v366, 96
      %v370 = vpop.permute.xlu0 %369
      %v372 = vmul.f32 %v367, %v370
      %373 = vrot.lane.b32.xlu0 %v266, 32
      %v374 = vpop.permute.xlu0 %373
      %v376 = vmul.f32 %v355, %v374
      %v377 = vadd.f32 %v372, %v376
      %379 = vrot.lane.b32.xlu0 %v377, 96
      %v380 = vpop.permute.xlu0 %379
      %vm382 = vcmask 257024
      %383 = vst.msk [vmem:[%s251] sm:$0xf] %vm382, %v380
      %s384 = scalar_lea.vmem %s245, 4
      %v385 = vld [vmem:[%s384] sm:$0xf]
      %v386 = vadd.f32 %v385, %v264
      %v387 = vsel %vm275, %v380, 0
      %389 = vmatprep.subr.mxu0 0.0
      %390 = vmatpush1.msra.mxu0 %v260
      %391 = vmatprep.subr.mxu0 0.0
      %392 = vmatpush1.msra.mxu0 %v261
      %393 = vmatprep.subr.mxu0 0.0
      %394 = vmatpush1.msra.mxu0 %v262
      %395 = vmatprep.subr.mxu0 0.0
      %396 = vmatpush1.msra.mxu0 %v263
      %397 = vmatprep.subr.mxu0 0.0
      %398 = vmatpush1.msra.mxu0 0.0
      %399 = vmatprep.subr.mxu0 0.0
      %400 = vmatpush1.msra.mxu0 0.0
      %401 = vmatprep.subr.mxu0 0.0
      %402 = vmatpush1.msra.mxu0 0.0
      %403 = vmatprep.subr.mxu0 0.0
      %404 = vmatpush1.msra.mxu0 0.0
      %405 = vmatprep.subr.mxu0 0.0
      %406 = vmatpush1.msra.mxu0 0.0
      %407 = vmatprep.subr.mxu0 0.0
      %408 = vmatpush1.msra.mxu0 0.0
      %409 = vmatprep.subr.mxu0 0.0
      %410 = vmatpush1.msra.mxu0 0.0
      %411 = vmatprep.subr.mxu0 0.0
      %412 = vmatpush1.msra.mxu0 0.0
      %413 = vmatprep.subr.mxu0 0.0
      %414 = vmatpush1.msra.mxu0 0.0
      %415 = vmatprep.subr.mxu0 0.0
      %416 = vmatpush1.msra.mxu0 0.0
      %417 = vmatprep.subr.mxu0 0.0
      %418 = vmatpush1.msra.mxu0 0.0
      %419 = vmatprep.subr.mxu0 0.0
      %420 = vmatpush1.msra.mxu0 0.0
      %421 = vmatprep.subr.mxu0 0.0
      %422 = vmatpush1.msra.mxu0 0.0
      %423 = vmatprep.subr.mxu0 0.0
      %424 = vmatpush1.msra.mxu0 0.0
      %425 = vmatprep.subr.mxu0 0.0
      %426 = vmatpush1.msra.mxu0 0.0
      %427 = vmatprep.subr.mxu0 0.0
      %428 = vmatpush1.msra.mxu0 0.0
      %429 = vmatprep.subr.mxu0 0.0
      %430 = vmatpush1.msra.mxu0 0.0
      %431 = vmatprep.subr.mxu0 0.0
      %432 = vmatpush1.msra.mxu0 0.0
      %433 = vmatprep.subr.mxu0 0.0
      %434 = vmatpush1.msra.mxu0 0.0
      %435 = vmatprep.subr.mxu0 0.0
      %436 = vmatpush1.msra.mxu0 0.0
      %437 = vmatprep.subr.mxu0 0.0
      %438 = vmatpush1.msra.mxu0 0.0
      %439 = vmatprep.subr.mxu0 0.0
      %440 = vmatpush1.msra.mxu0 0.0
      %441 = vmatprep.subr.mxu0 0.0
      %442 = vmatpush1.msra.mxu0 0.0
      %443 = vmatprep.subr.mxu0 0.0
      %444 = vmatpush1.msra.mxu0 0.0
      %445 = vmatprep.subr.mxu0 0.0
      %446 = vmatpush1.msra.mxu0 0.0
      %447 = vmatprep.subr.mxu0 0.0
      %448 = vmatpush1.msra.mxu0 0.0
      %449 = vmatprep.subr.mxu0 0.0
      %450 = vmatpush1.msra.mxu0 0.0
      %451 = vmatprep.subr.mxu0 0.0
      %452 = vmatpush1.msra.mxu0 0.0
      %453 = vmatprep.mubr.f32.mxu0 0.0
      %454 = vmatmul.mubr.f32.gmra.mrb[0].mxu0 %v387
      %v455 = vpop.f32.mrb[0].mxu0
      %v456 = vadd.f32 %v273, %v455
      %v457 = vpop.f32.mrb[0].mxu0
      %458 = vdwg.mxu0
      %v459 = vadd.f32 %v386, %v456
      %v460 = vsub.f32 0.0, %v459
      %v461 = vmul.f32 %v460, 1.442695
      %v462 = vpow.pop %v461
      %v463 = vadd.f32 %v462, 1.0
      %v464 = vrcp.pop %v463
      %v465 = vmul.f32 1.0, %v464
      %467 = vrot.lane.b32.xlu0 %v456, 64
      %v468 = vpop.permute.xlu0 %467
      %v470 = vmul.f32 %v465, %v468
      %472 = vrot.lane.b32.xlu0 %v470, 64
      %v473 = vpop.permute.xlu0 %472
      %v475 = vadd.f32 %v386, %v473
      %v476 = vtanh.pop %v475
      %v477 = vsub.f32 1.0, %v465
      %479 = vrot.lane.b32.xlu0 %v476, 96
      %v480 = vpop.permute.xlu0 %479
      %v482 = vmul.f32 %v477, %v480
      %v483 = vmul.f32 %v465, %v377
      %v484 = vadd.f32 %v482, %v483
      %486 = vrot.lane.b32.xlu0 %v484, 96
      %v487 = vpop.permute.xlu0 %486
      %s489 = scalar_lea.vmem %s251, 4
      %490 = vst.msk [vmem:[%s489] sm:$0xf] %vm382, %v487
      %s491 = scalar_lea.vmem %s245, 8
      %v492 = vld [vmem:[%s491] sm:$0xf]
      %v493 = vadd.f32 %v492, %v264
      %v494 = vsel %vm275, %v487, 0
      %496 = vmatprep.subr.mxu0 0.0
      %497 = vmatpush1.msra.mxu0 %v260
      %498 = vmatprep.subr.mxu0 0.0
      %499 = vmatpush1.msra.mxu0 %v261
      %500 = vmatprep.subr.mxu0 0.0
      %501 = vmatpush1.msra.mxu0 %v262
      %502 = vmatprep.subr.mxu0 0.0
      %503 = vmatpush1.msra.mxu0 %v263
      %504 = vmatprep.subr.mxu0 0.0
      %505 = vmatpush1.msra.mxu0 0.0
      %506 = vmatprep.subr.mxu0 0.0
      %507 = vmatpush1.msra.mxu0 0.0
      %508 = vmatprep.subr.mxu0 0.0
      %509 = vmatpush1.msra.mxu0 0.0
      %510 = vmatprep.subr.mxu0 0.0
      %511 = vmatpush1.msra.mxu0 0.0
      %512 = vmatprep.subr.mxu0 0.0
      %513 = vmatpush1.msra.mxu0 0.0
      %514 = vmatprep.subr.mxu0 0.0
      %515 = vmatpush1.msra.mxu0 0.0
      %516 = vmatprep.subr.mxu0 0.0
      %517 = vmatpush1.msra.mxu0 0.0
      %518 = vmatprep.subr.mxu0 0.0
      %519 = vmatpush1.msra.mxu0 0.0
      %520 = vmatprep.subr.mxu0 0.0
      %521 = vmatpush1.msra.mxu0 0.0
      %522 = vmatprep.subr.mxu0 0.0
      %523 = vmatpush1.msra.mxu0 0.0
      %524 = vmatprep.subr.mxu0 0.0
      %525 = vmatpush1.msra.mxu0 0.0
      %526 = vmatprep.subr.mxu0 0.0
      %527 = vmatpush1.msra.mxu0 0.0
      %528 = vmatprep.subr.mxu0 0.0
      %529 = vmatpush1.msra.mxu0 0.0
      %530 = vmatprep.subr.mxu0 0.0
      %531 = vmatpush1.msra.mxu0 0.0
      %532 = vmatprep.subr.mxu0 0.0
      %533 = vmatpush1.msra.mxu0 0.0
      %534 = vmatprep.subr.mxu0 0.0
      %535 = vmatpush1.msra.mxu0 0.0
      %536 = vmatprep.subr.mxu0 0.0
      %537 = vmatpush1.msra.mxu0 0.0
      %538 = vmatprep.subr.mxu0 0.0
      %539 = vmatpush1.msra.mxu0 0.0
      %540 = vmatprep.subr.mxu0 0.0
      %541 = vmatpush1.msra.mxu0 0.0
      %542 = vmatprep.subr.mxu0 0.0
      %543 = vmatpush1.msra.mxu0 0.0
      %544 = vmatprep.subr.mxu0 0.0
      %545 = vmatpush1.msra.mxu0 0.0
      %546 = vmatprep.subr.mxu0 0.0
      %547 = vmatpush1.msra.mxu0 0.0
      %548 = vmatprep.subr.mxu0 0.0
      %549 = vmatpush1.msra.mxu0 0.0
      %550 = vmatprep.subr.mxu0 0.0
      %551 = vmatpush1.msra.mxu0 0.0
      %552 = vmatprep.subr.mxu0 0.0
      %553 = vmatpush1.msra.mxu0 0.0
      %554 = vmatprep.subr.mxu0 0.0
      %555 = vmatpush1.msra.mxu0 0.0
      %556 = vmatprep.subr.mxu0 0.0
      %557 = vmatpush1.msra.mxu0 0.0
      %558 = vmatprep.subr.mxu0 0.0
      %559 = vmatpush1.msra.mxu0 0.0
      %560 = vmatprep.mubr.f32.mxu0 0.0
      %561 = vmatmul.mubr.f32.gmra.mrb[0].mxu0 %v494
      %v562 = vpop.f32.mrb[0].mxu0
      %v563 = vadd.f32 %v273, %v562
      %v564 = vpop.f32.mrb[0].mxu0
      %565 = vdwg.mxu0
      %v566 = vadd.f32 %v493, %v563
      %v567 = vsub.f32 0.0, %v566
      %v568 = vmul.f32 %v567, 1.442695
      %v569 = vpow.pop %v568
      %v570 = vadd.f32 %v569, 1.0
      %v571 = vrcp.pop %v570
      %v572 = vmul.f32 1.0, %v571
      %574 = vrot.lane.b32.xlu0 %v563, 64
      %v575 = vpop.permute.xlu0 %574
      %v577 = vmul.f32 %v572, %v575
      %579 = vrot.lane.b32.xlu0 %v577, 64
      %v580 = vpop.permute.xlu0 %579
      %v582 = vadd.f32 %v493, %v580
      %v583 = vtanh.pop %v582
      %v584 = vsub.f32 1.0, %v572
      %586 = vrot.lane.b32.xlu0 %v583, 96
      %v587 = vpop.permute.xlu0 %586
      %v589 = vmul.f32 %v584, %v587
      %v590 = vmul.f32 %v572, %v484
      %v591 = vadd.f32 %v589, %v590
      %593 = vrot.lane.b32.xlu0 %v591, 96
      %v594 = vpop.permute.xlu0 %593
      %s596 = scalar_lea.vmem %s251, 8
      %597 = vst.msk [vmem:[%s596] sm:$0xf] %vm382, %v594
      %s598 = scalar_lea.vmem %s245, 12
      %v599 = vld [vmem:[%s598] sm:$0xf]
      %v600 = vadd.f32 %v599, %v264
      %v601 = vsel %vm275, %v594, 0
      %603 = vmatprep.subr.mxu0 0.0
      %604 = vmatpush1.msra.mxu0 %v260
      %605 = vmatprep.subr.mxu0 0.0
      %606 = vmatpush1.msra.mxu0 %v261
      %607 = vmatprep.subr.mxu0 0.0
      %608 = vmatpush1.msra.mxu0 %v262
      %609 = vmatprep.subr.mxu0 0.0
      %610 = vmatpush1.msra.mxu0 %v263
      %611 = vmatprep.subr.mxu0 0.0
      %612 = vmatpush1.msra.mxu0 0.0
      %613 = vmatprep.subr.mxu0 0.0
      %614 = vmatpush1.msra.mxu0 0.0
      %615 = vmatprep.subr.mxu0 0.0
      %616 = vmatpush1.msra.mxu0 0.0
      %617 = vmatprep.subr.mxu0 0.0
      %618 = vmatpush1.msra.mxu0 0.0
      %619 = vmatprep.subr.mxu0 0.0
      %620 = vmatpush1.msra.mxu0 0.0
      %621 = vmatprep.subr.mxu0 0.0
      %622 = vmatpush1.msra.mxu0 0.0
      %623 = vmatprep.subr.mxu0 0.0
      %624 = vmatpush1.msra.mxu0 0.0
      %625 = vmatprep.subr.mxu0 0.0
      %626 = vmatpush1.msra.mxu0 0.0
      %627 = vmatprep.subr.mxu0 0.0
      %628 = vmatpush1.msra.mxu0 0.0
      %629 = vmatprep.subr.mxu0 0.0
      %630 = vmatpush1.msra.mxu0 0.0
      %631 = vmatprep.subr.mxu0 0.0
      %632 = vmatpush1.msra.mxu0 0.0
      %633 = vmatprep.subr.mxu0 0.0
      %634 = vmatpush1.msra.mxu0 0.0
      %635 = vmatprep.subr.mxu0 0.0
      %636 = vmatpush1.msra.mxu0 0.0
      %637 = vmatprep.subr.mxu0 0.0
      %638 = vmatpush1.msra.mxu0 0.0
      %639 = vmatprep.subr.mxu0 0.0
      %640 = vmatpush1.msra.mxu0 0.0
      %641 = vmatprep.subr.mxu0 0.0
      %642 = vmatpush1.msra.mxu0 0.0
      %643 = vmatprep.subr.mxu0 0.0
      %644 = vmatpush1.msra.mxu0 0.0
      %645 = vmatprep.subr.mxu0 0.0
      %646 = vmatpush1.msra.mxu0 0.0
      %647 = vmatprep.subr.mxu0 0.0
      %648 = vmatpush1.msra.mxu0 0.0
      %649 = vmatprep.subr.mxu0 0.0
      %650 = vmatpush1.msra.mxu0 0.0
      %651 = vmatprep.subr.mxu0 0.0
      %652 = vmatpush1.msra.mxu0 0.0
      %653 = vmatprep.subr.mxu0 0.0
      %654 = vmatpush1.msra.mxu0 0.0
      %655 = vmatprep.subr.mxu0 0.0
      %656 = vmatpush1.msra.mxu0 0.0
      %657 = vmatprep.subr.mxu0 0.0
      %658 = vmatpush1.msra.mxu0 0.0
      %659 = vmatprep.subr.mxu0 0.0
      %660 = vmatpush1.msra.mxu0 0.0
      %661 = vmatprep.subr.mxu0 0.0
      %662 = vmatpush1.msra.mxu0 0.0
      %663 = vmatprep.subr.mxu0 0.0
      %664 = vmatpush1.msra.mxu0 0.0
      %665 = vmatprep.subr.mxu0 0.0
      %666 = vmatpush1.msra.mxu0 0.0
      %667 = vmatprep.mubr.f32.mxu0 0.0
      %668 = vmatmul.mubr.f32.gmra.mrb[0].mxu0 %v601
      %v669 = vpop.f32.mrb[0].mxu0
      %v670 = vadd.f32 %v273, %v669
      %v671 = vpop.f32.mrb[0].mxu0
      %672 = vdwg.mxu0
      %v673 = vadd.f32 %v600, %v670
      %v674 = vsub.f32 0.0, %v673
      %v675 = vmul.f32 %v674, 1.442695
      %v676 = vpow.pop %v675
      %v677 = vadd.f32 %v676, 1.0
      %v678 = vrcp.pop %v677
      %v679 = vmul.f32 1.0, %v678
      %681 = vrot.lane.b32.xlu0 %v670, 64
      %v682 = vpop.permute.xlu0 %681
      %v684 = vmul.f32 %v679, %v682
      %686 = vrot.lane.b32.xlu0 %v684, 64
      %v687 = vpop.permute.xlu0 %686
      %v689 = vadd.f32 %v600, %v687
      %v690 = vtanh.pop %v689
      %v691 = vsub.f32 1.0, %v679
      %693 = vrot.lane.b32.xlu0 %v690, 96
      %v694 = vpop.permute.xlu0 %693
      %v696 = vmul.f32 %v691, %v694
      %v697 = vmul.f32 %v679, %v591
      %v698 = vadd.f32 %v696, %v697
      %700 = vrot.lane.b32.xlu0 %v698, 96
      %v701 = vpop.permute.xlu0 %700
      %s703 = scalar_lea.vmem %s251, 12
      %704 = vst.msk [vmem:[%s703] sm:$0xf] %vm382, %v701
      %s705 = scalar_lea.vmem %s245, 16
      %v706 = vld [vmem:[%s705] sm:$0xf]
      %v707 = vadd.f32 %v706, %v264
      %v708 = vsel %vm275, %v701, 0
      %710 = vmatprep.subr.mxu0 0.0
      %711 = vmatpush1.msra.mxu0 %v260
      %712 = vmatprep.subr.mxu0 0.0
      %713 = vmatpush1.msra.mxu0 %v261
      %714 = vmatprep.subr.mxu0 0.0
      %715 = vmatpush1.msra.mxu0 %v262
      %716 = vmatprep.subr.mxu0 0.0
      %717 = vmatpush1.msra.mxu0 %v263
      %718 = vmatprep.subr.mxu0 0.0
      %719 = vmatpush1.msra.mxu0 0.0
      %720 = vmatprep.subr.mxu0 0.0
      %721 = vmatpush1.msra.mxu0 0.0
      %722 = vmatprep.subr.mxu0 0.0
      %723 = vmatpush1.msra.mxu0 0.0
      %724 = vmatprep.subr.mxu0 0.0
      %725 = vmatpush1.msra.mxu0 0.0
      %726 = vmatprep.subr.mxu0 0.0
      %727 = vmatpush1.msra.mxu0 0.0
      %728 = vmatprep.subr.mxu0 0.0
      %729 = vmatpush1.msra.mxu0 0.0
      %730 = vmatprep.subr.mxu0 0.0
      %731 = vmatpush1.msra.mxu0 0.0
      %732 = vmatprep.subr.mxu0 0.0
      %733 = vmatpush1.msra.mxu0 0.0
      %734 = vmatprep.subr.mxu0 0.0
      %735 = vmatpush1.msra.mxu0 0.0
      %736 = vmatprep.subr.mxu0 0.0
      %737 = vmatpush1.msra.mxu0 0.0
      %738 = vmatprep.subr.mxu0 0.0
      %739 = vmatpush1.msra.mxu0 0.0
      %740 = vmatprep.subr.mxu0 0.0
      %741 = vmatpush1.msra.mxu0 0.0
      %742 = vmatprep.subr.mxu0 0.0
      %743 = vmatpush1.msra.mxu0 0.0
      %744 = vmatprep.subr.mxu0 0.0
      %745 = vmatpush1.msra.mxu0 0.0
      %746 = vmatprep.subr.mxu0 0.0
      %747 = vmatpush1.msra.mxu0 0.0
      %748 = vmatprep.subr.mxu0 0.0
      %749 = vmatpush1.msra.mxu0 0.0
      %750 = vmatprep.subr.mxu0 0.0
      %751 = vmatpush1.msra.mxu0 0.0
      %752 = vmatprep.subr.mxu0 0.0
      %753 = vmatpush1.msra.mxu0 0.0
      %754 = vmatprep.subr.mxu0 0.0
      %755 = vmatpush1.msra.mxu0 0.0
      %756 = vmatprep.subr.mxu0 0.0
      %757 = vmatpush1.msra.mxu0 0.0
      %758 = vmatprep.subr.mxu0 0.0
      %759 = vmatpush1.msra.mxu0 0.0
      %760 = vmatprep.subr.mxu0 0.0
      %761 = vmatpush1.msra.mxu0 0.0
      %762 = vmatprep.subr.mxu0 0.0
      %763 = vmatpush1.msra.mxu0 0.0
      %764 = vmatprep.subr.mxu0 0.0
      %765 = vmatpush1.msra.mxu0 0.0
      %766 = vmatprep.subr.mxu0 0.0
      %767 = vmatpush1.msra.mxu0 0.0
      %768 = vmatprep.subr.mxu0 0.0
      %769 = vmatpush1.msra.mxu0 0.0
      %770 = vmatprep.subr.mxu0 0.0
      %771 = vmatpush1.msra.mxu0 0.0
      %772 = vmatprep.subr.mxu0 0.0
      %773 = vmatpush1.msra.mxu0 0.0
      %774 = vmatprep.mubr.f32.mxu0 0.0
      %775 = vmatmul.mubr.f32.gmra.mrb[0].mxu0 %v708
      %v776 = vpop.f32.mrb[0].mxu0
      %v777 = vadd.f32 %v273, %v776
      %v778 = vpop.f32.mrb[0].mxu0
      %779 = vdwg.mxu0
      %v780 = vadd.f32 %v707, %v777
      %v781 = vsub.f32 0.0, %v780
      %v782 = vmul.f32 %v781, 1.442695
      %v783 = vpow.pop %v782
      %v784 = vadd.f32 %v783, 1.0
      %v785 = vrcp.pop %v784
      %v786 = vmul.f32 1.0, %v785
      %788 = vrot.lane.b32.xlu0 %v777, 64
      %v789 = vpop.permute.xlu0 %788
      %v791 = vmul.f32 %v786, %v789
      %793 = vrot.lane.b32.xlu0 %v791, 64
      %v794 = vpop.permute.xlu0 %793
      %v796 = vadd.f32 %v707, %v794
      %v797 = vtanh.pop %v796
      %v798 = vsub.f32 1.0, %v786
      %800 = vrot.lane.b32.xlu0 %v797, 96
      %v801 = vpop.permute.xlu0 %800
      %v803 = vmul.f32 %v798, %v801
      %v804 = vmul.f32 %v786, %v698
      %v805 = vadd.f32 %v803, %v804
      %807 = vrot.lane.b32.xlu0 %v805, 96
      %v808 = vpop.permute.xlu0 %807
      %s810 = scalar_lea.vmem %s251, 16
      %811 = vst.msk [vmem:[%s810] sm:$0xf] %vm382, %v808
      %s812 = scalar_lea.vmem %s245, 20
      %v813 = vld [vmem:[%s812] sm:$0xf]
      %v814 = vadd.f32 %v813, %v264
      %v815 = vsel %vm275, %v808, 0
      %817 = vmatprep.subr.mxu0 0.0
      %818 = vmatpush1.msra.mxu0 %v260
      %819 = vmatprep.subr.mxu0 0.0
      %820 = vmatpush1.msra.mxu0 %v261
      %821 = vmatprep.subr.mxu0 0.0
      %822 = vmatpush1.msra.mxu0 %v262
      %823 = vmatprep.subr.mxu0 0.0
      %824 = vmatpush1.msra.mxu0 %v263
      %825 = vmatprep.subr.mxu0 0.0
      %826 = vmatpush1.msra.mxu0 0.0
      %827 = vmatprep.subr.mxu0 0.0
      %828 = vmatpush1.msra.mxu0 0.0
      %829 = vmatprep.subr.mxu0 0.0
      %830 = vmatpush1.msra.mxu0 0.0
      %831 = vmatprep.subr.mxu0 0.0
      %832 = vmatpush1.msra.mxu0 0.0
      %833 = vmatprep.subr.mxu0 0.0
      %834 = vmatpush1.msra.mxu0 0.0
      %835 = vmatprep.subr.mxu0 0.0
      %836 = vmatpush1.msra.mxu0 0.0
      %837 = vmatprep.subr.mxu0 0.0
      %838 = vmatpush1.msra.mxu0 0.0
      %839 = vmatprep.subr.mxu0 0.0
      %840 = vmatpush1.msra.mxu0 0.0
      %841 = vmatprep.subr.mxu0 0.0
      %842 = vmatpush1.msra.mxu0 0.0
      %843 = vmatprep.subr.mxu0 0.0
      %844 = vmatpush1.msra.mxu0 0.0
      %845 = vmatprep.subr.mxu0 0.0
      %846 = vmatpush1.msra.mxu0 0.0
      %847 = vmatprep.subr.mxu0 0.0
      %848 = vmatpush1.msra.mxu0 0.0
      %849 = vmatprep.subr.mxu0 0.0
      %850 = vmatpush1.msra.mxu0 0.0
      %851 = vmatprep.subr.mxu0 0.0
      %852 = vmatpush1.msra.mxu0 0.0
      %853 = vmatprep.subr.mxu0 0.0
      %854 = vmatpush1.msra.mxu0 0.0
      %855 = vmatprep.subr.mxu0 0.0
      %856 = vmatpush1.msra.mxu0 0.0
      %857 = vmatprep.subr.mxu0 0.0
      %858 = vmatpush1.msra.mxu0 0.0
      %859 = vmatprep.subr.mxu0 0.0
      %860 = vmatpush1.msra.mxu0 0.0
      %861 = vmatprep.subr.mxu0 0.0
      %862 = vmatpush1.msra.mxu0 0.0
      %863 = vmatprep.subr.mxu0 0.0
      %864 = vmatpush1.msra.mxu0 0.0
      %865 = vmatprep.subr.mxu0 0.0
      %866 = vmatpush1.msra.mxu0 0.0
      %867 = vmatprep.subr.mxu0 0.0
      %868 = vmatpush1.msra.mxu0 0.0
      %869 = vmatprep.subr.mxu0 0.0
      %870 = vmatpush1.msra.mxu0 0.0
      %871 = vmatprep.subr.mxu0 0.0
      %872 = vmatpush1.msra.mxu0 0.0
      %873 = vmatprep.subr.mxu0 0.0
      %874 = vmatpush1.msra.mxu0 0.0
      %875 = vmatprep.subr.mxu0 0.0
      %876 = vmatpush1.msra.mxu0 0.0
      %877 = vmatprep.subr.mxu0 0.0
      %878 = vmatpush1.msra.mxu0 0.0
      %879 = vmatprep.subr.mxu0 0.0
      %880 = vmatpush1.msra.mxu0 0.0
      %881 = vmatprep.mubr.f32.mxu0 0.0
      %882 = vmatmul.mubr.f32.gmra.mrb[0].mxu0 %v815
      %v883 = vpop.f32.mrb[0].mxu0
      %v884 = vadd.f32 %v273, %v883
      %v885 = vpop.f32.mrb[0].mxu0
      %886 = vdwg.mxu0
      %v887 = vadd.f32 %v814, %v884
      %v888 = vsub.f32 0.0, %v887
      %v889 = vmul.f32 %v888, 1.442695
      %v890 = vpow.pop %v889
      %v891 = vadd.f32 %v890, 1.0
      %v892 = vrcp.pop %v891
      %v893 = vmul.f32 1.0, %v892
      %895 = vrot.lane.b32.xlu0 %v884, 64
      %v896 = vpop.permute.xlu0 %895
      %v898 = vmul.f32 %v893, %v896
      %900 = vrot.lane.b32.xlu0 %v898, 64
      %v901 = vpop.permute.xlu0 %900
      %v903 = vadd.f32 %v814, %v901
      %v904 = vtanh.pop %v903
      %v905 = vsub.f32 1.0, %v893
      %907 = vrot.lane.b32.xlu0 %v904, 96
      %v908 = vpop.permute.xlu0 %907
      %v910 = vmul.f32 %v905, %v908
      %v911 = vmul.f32 %v893, %v805
      %v912 = vadd.f32 %v910, %v911
      %914 = vrot.lane.b32.xlu0 %v912, 96
      %v915 = vpop.permute.xlu0 %914
      %s917 = scalar_lea.vmem %s251, 20
      %918 = vst.msk [vmem:[%s917] sm:$0xf] %vm382, %v915
      %s919 = scalar_lea.vmem %s245, 24
      %v920 = vld [vmem:[%s919] sm:$0xf]
      %v921 = vadd.f32 %v920, %v264
      %v922 = vsel %vm275, %v915, 0
      %924 = vmatprep.subr.mxu0 0.0
      %925 = vmatpush1.msra.mxu0 %v260
      %926 = vmatprep.subr.mxu0 0.0
      %927 = vmatpush1.msra.mxu0 %v261
      %928 = vmatprep.subr.mxu0 0.0
      %929 = vmatpush1.msra.mxu0 %v262
      %930 = vmatprep.subr.mxu0 0.0
      %931 = vmatpush1.msra.mxu0 %v263
      %932 = vmatprep.subr.mxu0 0.0
      %933 = vmatpush1.msra.mxu0 0.0
      %934 = vmatprep.subr.mxu0 0.0
      %935 = vmatpush1.msra.mxu0 0.0
      %936 = vmatprep.subr.mxu0 0.0
      %937 = vmatpush1.msra.mxu0 0.0
      %938 = vmatprep.subr.mxu0 0.0
      %939 = vmatpush1.msra.mxu0 0.0
      %940 = vmatprep.subr.mxu0 0.0
      %941 = vmatpush1.msra.mxu0 0.0
      %942 = vmatprep.subr.mxu0 0.0
      %943 = vmatpush1.msra.mxu0 0.0
      %944 = vmatprep.subr.mxu0 0.0
      %945 = vmatpush1.msra.mxu0 0.0
      %946 = vmatprep.subr.mxu0 0.0
      %947 = vmatpush1.msra.mxu0 0.0
      %948 = vmatprep.subr.mxu0 0.0
      %949 = vmatpush1.msra.mxu0 0.0
      %950 = vmatprep.subr.mxu0 0.0
      %951 = vmatpush1.msra.mxu0 0.0
      %952 = vmatprep.subr.mxu0 0.0
      %953 = vmatpush1.msra.mxu0 0.0
      %954 = vmatprep.subr.mxu0 0.0
      %955 = vmatpush1.msra.mxu0 0.0
      %956 = vmatprep.subr.mxu0 0.0
      %957 = vmatpush1.msra.mxu0 0.0
      %958 = vmatprep.subr.mxu0 0.0
      %959 = vmatpush1.msra.mxu0 0.0
      %960 = vmatprep.subr.mxu0 0.0
      %961 = vmatpush1.msra.mxu0 0.0
      %962 = vmatprep.subr.mxu0 0.0
      %963 = vmatpush1.msra.mxu0 0.0
      %964 = vmatprep.subr.mxu0 0.0
      %965 = vmatpush1.msra.mxu0 0.0
      %966 = vmatprep.subr.mxu0 0.0
      %967 = vmatpush1.msra.mxu0 0.0
      %968 = vmatprep.subr.mxu0 0.0
      %969 = vmatpush1.msra.mxu0 0.0
      %970 = vmatprep.subr.mxu0 0.0
      %971 = vmatpush1.msra.mxu0 0.0
      %972 = vmatprep.subr.mxu0 0.0
      %973 = vmatpush1.msra.mxu0 0.0
      %974 = vmatprep.subr.mxu0 0.0
      %975 = vmatpush1.msra.mxu0 0.0
      %976 = vmatprep.subr.mxu0 0.0
      %977 = vmatpush1.msra.mxu0 0.0
      %978 = vmatprep.subr.mxu0 0.0
      %979 = vmatpush1.msra.mxu0 0.0
      %980 = vmatprep.subr.mxu0 0.0
      %981 = vmatpush1.msra.mxu0 0.0
      %982 = vmatprep.subr.mxu0 0.0
      %983 = vmatpush1.msra.mxu0 0.0
      %984 = vmatprep.subr.mxu0 0.0
      %985 = vmatpush1.msra.mxu0 0.0
      %986 = vmatprep.subr.mxu0 0.0
      %987 = vmatpush1.msra.mxu0 0.0
      %988 = vmatprep.mubr.f32.mxu0 0.0
      %989 = vmatmul.mubr.f32.gmra.mrb[0].mxu0 %v922
      %v990 = vpop.f32.mrb[0].mxu0
      %v991 = vadd.f32 %v273, %v990
      %v992 = vpop.f32.mrb[0].mxu0
      %993 = vdwg.mxu0
      %v994 = vadd.f32 %v921, %v991
      %v995 = vsub.f32 0.0, %v994
      %v996 = vmul.f32 %v995, 1.442695
      %v997 = vpow.pop %v996
      %v998 = vadd.f32 %v997, 1.0
      %v999 = vrcp.pop %v998
      %v1000 = vmul.f32 1.0, %v999
      %1002 = vrot.lane.b32.xlu0 %v991, 64
      %v1003 = vpop.permute.xlu0 %1002
      %v1005 = vmul.f32 %v1000, %v1003
      %1007 = vrot.lane.b32.xlu0 %v1005, 64
      %v1008 = vpop.permute.xlu0 %1007
      %v1010 = vadd.f32 %v921, %v1008
      %v1011 = vtanh.pop %v1010
      %v1012 = vsub.f32 1.0, %v1000
      %1014 = vrot.lane.b32.xlu0 %v1011, 96
      %v1015 = vpop.permute.xlu0 %1014
      %v1017 = vmul.f32 %v1012, %v1015
      %v1018 = vmul.f32 %v1000, %v912
      %v1019 = vadd.f32 %v1017, %v1018
      %1021 = vrot.lane.b32.xlu0 %v1019, 96
      %v1022 = vpop.permute.xlu0 %1021
      %s1024 = scalar_lea.vmem %s251, 24
      %1025 = vst.msk [vmem:[%s1024] sm:$0xf] %vm382, %v1022
      %s1026 = scalar_lea.vmem %s245, 28
      %v1027 = vld [vmem:[%s1026] sm:$0xf]
      %v1028 = vadd.f32 %v1027, %v264
      %v1029 = vsel %vm275, %v1022, 0
      %1031 = vmatprep.subr.mxu0 0.0
      %1032 = vmatpush1.msra.mxu0 %v260
      %1033 = vmatprep.subr.mxu0 0.0
      %1034 = vmatpush1.msra.mxu0 %v261
      %1035 = vmatprep.subr.mxu0 0.0
      %1036 = vmatpush1.msra.mxu0 %v262
      %1037 = vmatprep.subr.mxu0 0.0
      %1038 = vmatpush1.msra.mxu0 %v263
      %1039 = vmatprep.subr.mxu0 0.0
      %1040 = vmatpush1.msra.mxu0 0.0
      %1041 = vmatprep.subr.mxu0 0.0
      %1042 = vmatpush1.msra.mxu0 0.0
      %1043 = vmatprep.subr.mxu0 0.0
      %1044 = vmatpush1.msra.mxu0 0.0
      %1045 = vmatprep.subr.mxu0 0.0
      %1046 = vmatpush1.msra.mxu0 0.0
      %1047 = vmatprep.subr.mxu0 0.0
      %1048 = vmatpush1.msra.mxu0 0.0
      %1049 = vmatprep.subr.mxu0 0.0
      %1050 = vmatpush1.msra.mxu0 0.0
      %1051 = vmatprep.subr.mxu0 0.0
      %1052 = vmatpush1.msra.mxu0 0.0
      %1053 = vmatprep.subr.mxu0 0.0
      %1054 = vmatpush1.msra.mxu0 0.0
      %1055 = vmatprep.subr.mxu0 0.0
      %1056 = vmatpush1.msra.mxu0 0.0
      %1057 = vmatprep.subr.mxu0 0.0
      %1058 = vmatpush1.msra.mxu0 0.0
      %1059 = vmatprep.subr.mxu0 0.0
      %1060 = vmatpush1.msra.mxu0 0.0
      %1061 = vmatprep.subr.mxu0 0.0
      %1062 = vmatpush1.msra.mxu0 0.0
      %1063 = vmatprep.subr.mxu0 0.0
      %1064 = vmatpush1.msra.mxu0 0.0
      %1065 = vmatprep.subr.mxu0 0.0
      %1066 = vmatpush1.msra.mxu0 0.0
      %1067 = vmatprep.subr.mxu0 0.0
      %1068 = vmatpush1.msra.mxu0 0.0
      %1069 = vmatprep.subr.mxu0 0.0
      %1070 = vmatpush1.msra.mxu0 0.0
      %1071 = vmatprep.subr.mxu0 0.0
      %1072 = vmatpush1.msra.mxu0 0.0
      %1073 = vmatprep.subr.mxu0 0.0
      %1074 = vmatpush1.msra.mxu0 0.0
      %1075 = vmatprep.subr.mxu0 0.0
      %1076 = vmatpush1.msra.mxu0 0.0
      %1077 = vmatprep.subr.mxu0 0.0
      %1078 = vmatpush1.msra.mxu0 0.0
      %1079 = vmatprep.subr.mxu0 0.0
      %1080 = vmatpush1.msra.mxu0 0.0
      %1081 = vmatprep.subr.mxu0 0.0
      %1082 = vmatpush1.msra.mxu0 0.0
      %1083 = vmatprep.subr.mxu0 0.0
      %1084 = vmatpush1.msra.mxu0 0.0
      %1085 = vmatprep.subr.mxu0 0.0
      %1086 = vmatpush1.msra.mxu0 0.0
      %1087 = vmatprep.subr.mxu0 0.0
      %1088 = vmatpush1.msra.mxu0 0.0
      %1089 = vmatprep.subr.mxu0 0.0
      %1090 = vmatpush1.msra.mxu0 0.0
      %1091 = vmatprep.subr.mxu0 0.0
      %1092 = vmatpush1.msra.mxu0 0.0
      %1093 = vmatprep.subr.mxu0 0.0
      %1094 = vmatpush1.msra.mxu0 0.0
      %1095 = vmatprep.mubr.f32.mxu0 0.0
      %1096 = vmatmul.mubr.f32.gmra.mrb[0].mxu0 %v1029
      %v1097 = vpop.f32.mrb[0].mxu0
      %v1098 = vadd.f32 %v273, %v1097
      %v1099 = vpop.f32.mrb[0].mxu0
      %1100 = vdwg.mxu0
      %v1101 = vadd.f32 %v1028, %v1098
      %v1102 = vsub.f32 0.0, %v1101
      %v1103 = vmul.f32 %v1102, 1.442695
      %v1104 = vpow.pop %v1103
      %v1105 = vadd.f32 %v1104, 1.0
      %v1106 = vrcp.pop %v1105
      %v1107 = vmul.f32 1.0, %v1106
      %1109 = vrot.lane.b32.xlu0 %v1098, 64
      %v1110 = vpop.permute.xlu0 %1109
      %v1112 = vmul.f32 %v1107, %v1110
      %1114 = vrot.lane.b32.xlu0 %v1112, 64
      %v1115 = vpop.permute.xlu0 %1114
      %v1117 = vadd.f32 %v1028, %v1115
      %v1118 = vtanh.pop %v1117
      %v1119 = vsub.f32 1.0, %v1107
      %1121 = vrot.lane.b32.xlu0 %v1118, 96
      %v1122 = vpop.permute.xlu0 %1121
      %v1124 = vmul.f32 %v1119, %v1122
      %v1125 = vmul.f32 %v1107, %v1019
      %v1126 = vadd.f32 %v1124, %v1125
      %1128 = vrot.lane.b32.xlu0 %v1126, 96
      %v1129 = vpop.permute.xlu0 %1128
      %s1131 = scalar_lea.vmem %s251, 28
      %1132 = vst.msk [vmem:[%s1131] sm:$0xf] %vm382, %v1129
      %s1133 = scalar_lea.vmem %s245, 32
      %v1134 = vld [vmem:[%s1133] sm:$0xf]
      %v1135 = vadd.f32 %v1134, %v264
      %v1136 = vsel %vm275, %v1129, 0
      %1138 = vmatprep.subr.mxu0 0.0
      %1139 = vmatpush1.msra.mxu0 %v260
      %1140 = vmatprep.subr.mxu0 0.0
      %1141 = vmatpush1.msra.mxu0 %v261
      %1142 = vmatprep.subr.mxu0 0.0
      %1143 = vmatpush1.msra.mxu0 %v262
      %1144 = vmatprep.subr.mxu0 0.0
      %1145 = vmatpush1.msra.mxu0 %v263
      %1146 = vmatprep.subr.mxu0 0.0
      %1147 = vmatpush1.msra.mxu0 0.0
      %1148 = vmatprep.subr.mxu0 0.0
      %1149 = vmatpush1.msra.mxu0 0.0
      %1150 = vmatprep.subr.mxu0 0.0
      %1151 = vmatpush1.msra.mxu0 0.0
      %1152 = vmatprep.subr.mxu0 0.0
      %1153 = vmatpush1.msra.mxu0 0.0
      %1154 = vmatprep.subr.mxu0 0.0
      %1155 = vmatpush1.msra.mxu0 0.0
      %1156 = vmatprep.subr.mxu0 0.0
      %1157 = vmatpush1.msra.mxu0 0.0
      %1158 = vmatprep.subr.mxu0 0.0
      %1159 = vmatpush1.msra.mxu0 0.0
      %1160 = vmatprep.subr.mxu0 0.0
      %1161 = vmatpush1.msra.mxu0 0.0
      %1162 = vmatprep.subr.mxu0 0.0
      %1163 = vmatpush1.msra.mxu0 0.0
      %1164 = vmatprep.subr.mxu0 0.0
      %1165 = vmatpush1.msra.mxu0 0.0
      %1166 = vmatprep.subr.mxu0 0.0
      %1167 = vmatpush1.msra.mxu0 0.0
      %1168 = vmatprep.subr.mxu0 0.0
      %1169 = vmatpush1.msra.mxu0 0.0
      %1170 = vmatprep.subr.mxu0 0.0
      %1171 = vmatpush1.msra.mxu0 0.0
      %1172 = vmatprep.subr.mxu0 0.0
      %1173 = vmatpush1.msra.mxu0 0.0
      %1174 = vmatprep.subr.mxu0 0.0
      %1175 = vmatpush1.msra.mxu0 0.0
      %1176 = vmatprep.subr.mxu0 0.0
      %1177 = vmatpush1.msra.mxu0 0.0
      %1178 = vmatprep.subr.mxu0 0.0
      %1179 = vmatpush1.msra.mxu0 0.0
      %1180 = vmatprep.subr.mxu0 0.0
      %1181 = vmatpush1.msra.mxu0 0.0
      %1182 = vmatprep.subr.mxu0 0.0
      %1183 = vmatpush1.msra.mxu0 0.0
      %1184 = vmatprep.subr.mxu0 0.0
      %1185 = vmatpush1.msra.mxu0 0.0
      %1186 = vmatprep.subr.mxu0 0.0
      %1187 = vmatpush1.msra.mxu0 0.0
      %1188 = vmatprep.subr.mxu0 0.0
      %1189 = vmatpush1.msra.mxu0 0.0
      %1190 = vmatprep.subr.mxu0 0.0
      %1191 = vmatpush1.msra.mxu0 0.0
      %1192 = vmatprep.subr.mxu0 0.0
      %1193 = vmatpush1.msra.mxu0 0.0
      %1194 = vmatprep.subr.mxu0 0.0
      %1195 = vmatpush1.msra.mxu0 0.0
      %1196 = vmatprep.subr.mxu0 0.0
      %1197 = vmatpush1.msra.mxu0 0.0
      %1198 = vmatprep.subr.mxu0 0.0
      %1199 = vmatpush1.msra.mxu0 0.0
      %1200 = vmatprep.subr.mxu0 0.0
      %1201 = vmatpush1.msra.mxu0 0.0
      %1202 = vmatprep.mubr.f32.mxu0 0.0
      %1203 = vmatmul.mubr.f32.gmra.mrb[0].mxu0 %v1136
      %v1204 = vpop.f32.mrb[0].mxu0
      %v1205 = vadd.f32 %v273, %v1204
      %v1206 = vpop.f32.mrb[0].mxu0
      %1207 = vdwg.mxu0
      %v1208 = vadd.f32 %v1135, %v1205
      %v1209 = vsub.f32 0.0, %v1208
      %v1210 = vmul.f32 %v1209, 1.442695
      %v1211 = vpow.pop %v1210
      %v1212 = vadd.f32 %v1211, 1.0
      %v1213 = vrcp.pop %v1212
      %v1214 = vmul.f32 1.0, %v1213
      %1216 = vrot.lane.b32.xlu0 %v1205, 64
      %v1217 = vpop.permute.xlu0 %1216
      %v1219 = vmul.f32 %v1214, %v1217
      %1221 = vrot.lane.b32.xlu0 %v1219, 64
      %v1222 = vpop.permute.xlu0 %1221
      %v1224 = vadd.f32 %v1135, %v1222
      %v1225 = vtanh.pop %v1224
      %v1226 = vsub.f32 1.0, %v1214
      %1228 = vrot.lane.b32.xlu0 %v1225, 96
      %v1229 = vpop.permute.xlu0 %1228
      %v1231 = vmul.f32 %v1226, %v1229
      %v1232 = vmul.f32 %v1214, %v1126
      %v1233 = vadd.f32 %v1231, %v1232
      %1235 = vrot.lane.b32.xlu0 %v1233, 96
      %v1236 = vpop.permute.xlu0 %1235
      %s1238 = scalar_lea.vmem %s251, 32
      %1239 = vst.msk [vmem:[%s1238] sm:$0xf] %vm382, %v1236
      %s1240 = scalar_lea.vmem %s245, 36
      %v1241 = vld [vmem:[%s1240] sm:$0xf]
      %v1242 = vadd.f32 %v1241, %v264
      %v1243 = vsel %vm275, %v1236, 0
      %1245 = vmatprep.subr.mxu0 0.0
      %1246 = vmatpush1.msra.mxu0 %v260
      %1247 = vmatprep.subr.mxu0 0.0
      %1248 = vmatpush1.msra.mxu0 %v261
      %1249 = vmatprep.subr.mxu0 0.0
      %1250 = vmatpush1.msra.mxu0 %v262
      %1251 = vmatprep.subr.mxu0 0.0
      %1252 = vmatpush1.msra.mxu0 %v263
      %1253 = vmatprep.subr.mxu0 0.0
      %1254 = vmatpush1.msra.mxu0 0.0
      %1255 = vmatprep.subr.mxu0 0.0
      %1256 = vmatpush1.msra.mxu0 0.0
      %1257 = vmatprep.subr.mxu0 0.0
      %1258 = vmatpush1.msra.mxu0 0.0
      %1259 = vmatprep.subr.mxu0 0.0
      %1260 = vmatpush1.msra.mxu0 0.0
      %1261 = vmatprep.subr.mxu0 0.0
      %1262 = vmatpush1.msra.mxu0 0.0
      %1263 = vmatprep.subr.mxu0 0.0
      %1264 = vmatpush1.msra.mxu0 0.0
      %1265 = vmatprep.subr.mxu0 0.0
      %1266 = vmatpush1.msra.mxu0 0.0
      %1267 = vmatprep.subr.mxu0 0.0
      %1268 = vmatpush1.msra.mxu0 0.0
      %1269 = vmatprep.subr.mxu0 0.0
      %1270 = vmatpush1.msra.mxu0 0.0
      %1271 = vmatprep.subr.mxu0 0.0
      %1272 = vmatpush1.msra.mxu0 0.0
      %1273 = vmatprep.subr.mxu0 0.0
      %1274 = vmatpush1.msra.mxu0 0.0
      %1275 = vmatprep.subr.mxu0 0.0
      %1276 = vmatpush1.msra.mxu0 0.0
      %1277 = vmatprep.subr.mxu0 0.0
      %1278 = vmatpush1.msra.mxu0 0.0
      %1279 = vmatprep.subr.mxu0 0.0
      %1280 = vmatpush1.msra.mxu0 0.0
      %1281 = vmatprep.subr.mxu0 0.0
      %1282 = vmatpush1.msra.mxu0 0.0
      %1283 = vmatprep.subr.mxu0 0.0
      %1284 = vmatpush1.msra.mxu0 0.0
      %1285 = vmatprep.subr.mxu0 0.0
      %1286 = vmatpush1.msra.mxu0 0.0
      %1287 = vmatprep.subr.mxu0 0.0
      %1288 = vmatpush1.msra.mxu0 0.0
      %1289 = vmatprep.subr.mxu0 0.0
      %1290 = vmatpush1.msra.mxu0 0.0
      %1291 = vmatprep.subr.mxu0 0.0
      %1292 = vmatpush1.msra.mxu0 0.0
      %1293 = vmatprep.subr.mxu0 0.0
      %1294 = vmatpush1.msra.mxu0 0.0
      %1295 = vmatprep.subr.mxu0 0.0
      %1296 = vmatpush1.msra.mxu0 0.0
      %1297 = vmatprep.subr.mxu0 0.0
      %1298 = vmatpush1.msra.mxu0 0.0
      %1299 = vmatprep.subr.mxu0 0.0
      %1300 = vmatpush1.msra.mxu0 0.0
      %1301 = vmatprep.subr.mxu0 0.0
      %1302 = vmatpush1.msra.mxu0 0.0
      %1303 = vmatprep.subr.mxu0 0.0
      %1304 = vmatpush1.msra.mxu0 0.0
      %1305 = vmatprep.subr.mxu0 0.0
      %1306 = vmatpush1.msra.mxu0 0.0
      %1307 = vmatprep.subr.mxu0 0.0
      %1308 = vmatpush1.msra.mxu0 0.0
      %1309 = vmatprep.mubr.f32.mxu0 0.0
      %1310 = vmatmul.mubr.f32.gmra.mrb[0].mxu0 %v1243
      %v1311 = vpop.f32.mrb[0].mxu0
      %v1312 = vadd.f32 %v273, %v1311
      %v1313 = vpop.f32.mrb[0].mxu0
      %1314 = vdwg.mxu0
      %v1315 = vadd.f32 %v1242, %v1312
      %v1316 = vsub.f32 0.0, %v1315
      %v1317 = vmul.f32 %v1316, 1.442695
      %v1318 = vpow.pop %v1317
      %v1319 = vadd.f32 %v1318, 1.0
      %v1320 = vrcp.pop %v1319
      %v1321 = vmul.f32 1.0, %v1320
      %1323 = vrot.lane.b32.xlu0 %v1312, 64
      %v1324 = vpop.permute.xlu0 %1323
      %v1326 = vmul.f32 %v1321, %v1324
      %1328 = vrot.lane.b32.xlu0 %v1326, 64
      %v1329 = vpop.permute.xlu0 %1328
      %v1331 = vadd.f32 %v1242, %v1329
      %v1332 = vtanh.pop %v1331
      %v1333 = vsub.f32 1.0, %v1321
      %1335 = vrot.lane.b32.xlu0 %v1332, 96
      %v1336 = vpop.permute.xlu0 %1335
      %v1338 = vmul.f32 %v1333, %v1336
      %v1339 = vmul.f32 %v1321, %v1233
      %v1340 = vadd.f32 %v1338, %v1339
      %1342 = vrot.lane.b32.xlu0 %v1340, 96
      %v1343 = vpop.permute.xlu0 %1342
      %s1345 = scalar_lea.vmem %s251, 36
      %1346 = vst.msk [vmem:[%s1345] sm:$0xf] %vm382, %v1343
      %1347 = vst.msk [vmem:[#allocation2] sm:$0xf] %vm382, %v1343
      %p1348 = scmp.eq.s32.totalorder %s18, 1
      // Predicated region
      $region45: #{seq2seq_decoder_forward.6} parent=39 // pred_check
        %p1349 = pneg %p1348
      $region46: #{seq2seq_decoder_forward.6} parent=39 // pred_check_branch
        %1351 = sbr.rel (%p1349) target = $region48
      $region47: #{seq2seq_decoder_forward.6} parent=39 // pred_region
        %1352 = vst.msk [vmem:[%s6] sm:$0xf] %vm382, %v1343
      $region48: #{seq2seq_decoder_forward.6} parent=39 // pred_fallthru
        _
      %s1353 = smul.u32 10, %s18
      %p1354 = scmp.lt.s32.totalorder %s1353, 19
      %s1355 = scalar_select %p1354, %s1353, 19
      %s1356 = smul.addr %s1355, 4
      %s1357 = scalar_lea.vmem %s5, %s1356
      // Predicated region
      $region49: #{seq2seq_decoder_forward.6} parent=39 // pred_check
        %p1358 = pneg %p146
      $region50: #{seq2seq_decoder_forward.6} parent=39 // pred_check_branch
        %1360 = sbr.rel (%p1358) target = $region52
      $region51: #{seq2seq_decoder_forward.6} parent=39 // pred_region
        %s1361 = smul.u32 10, %s18
      $region52: #{seq2seq_decoder_forward.6} parent=39 // pred_fallthru
        _
      // Predicated region
      $region53: #{seq2seq_decoder_forward.6} parent=39 // pred_check
        %p1362 = pneg %p167
      $region54: #{seq2seq_decoder_forward.6} parent=39 // pred_check_branch
        %1364 = sbr.rel (%p1362) target = $region56
      $region55: #{seq2seq_decoder_forward.6} parent=39 // pred_region
        _
      $region56: #{seq2seq_decoder_forward.6} parent=39 // pred_fallthru
        _
      // Predicated region
      $region57: #{seq2seq_decoder_forward.6} parent=39 // pred_check
        %p1365 = pneg %p167
      $region58: #{seq2seq_decoder_forward.6} parent=39 // pred_check_branch
        %1367 = sbr.rel (%p1365) target = $region60
      $region59: #{seq2seq_decoder_forward.6} parent=39 // pred_region
        _
      $region60: #{seq2seq_decoder_forward.6} parent=39 // pred_fallthru
        _
    $region40: #{seq2seq_decoder_forward.6} parent=5 // pred_fallthru
      _
    %p1368 = scmp.le.s32.totalorder 2, %s13
    // Predicated region
    $region61: #{seq2seq_decoder_forward.6} parent=5 // pred_check
      %p1369 = pneg %p1368
    $region62: #{seq2seq_decoder_forward.6} parent=5 // pred_check_branch
      %1371 = sbr.rel (%p1369) target = $region64
    $region63: #{seq2seq_decoder_forward.6} parent=5 // pred_region
      %s1372 = ssub.s32 %s13, 2
      // Predicated region
      $region65: #{seq2seq_decoder_forward.6} parent=63 // pred_check
        %p1373 = pneg %p152
      $region66: #{seq2seq_decoder_forward.6} parent=63 // pred_check_branch
        %1375 = sbr.rel (%p1373) target = $region68
      $region67: #{seq2seq_decoder_forward.6} parent=63 // pred_region
        %s1376 = smul.u32 10, %s19
        %p1377 = scmp.lt.s32.totalorder %s1376, 19
        %s1378 = scalar_select %p1377, %s1376, 19
        %s1379 = smul.addr %s1378, 4
        %s1380 = scalar_lea.vmem %s5, %s1379
      $region68: #{seq2seq_decoder_forward.6} parent=63 // pred_fallthru
        _
    $region64: #{seq2seq_decoder_forward.6} parent=5 // pred_fallthru
      _
  $region6: #{seq2seq_decoder_forward.6} parent=0 // loop_footer
    %s17 = sadd.s32 1, %s13
  $region7: #{seq2seq_decoder_forward.6} parent=0 // loop_footer_branch
    %12 = sbr.rel target = $region3
  $region8: #{seq2seq_decoder_forward.6} parent=0 // loop_exit
    _

// kernel: seq2seq_decoder_forward.9
$region0: #{seq2seq_decoder_forward.9}
  #allocation0 [shape = 'u32[]', space=smem, size = 0x4, offset = 0x4, fixed_abs, tag = 'smem constant byte address 0x4 - core index']
  #allocation1 [shape = 'u32[144,128]{1,0:T(1,128)}', space=vmem, size = 0x12000, scoped, tag = 'internal scratch']
  %s0 = inlined_call_operand.vmem [shape: f32[80,32], index: 0, kind: input, shape index: {}]
  %s1 = inlined_call_operand.vmem [shape: f32[32,128], index: 1, kind: input, shape index: {}]
  %s2 = inlined_call_operand.vmem [shape: f32[1,128], index: 2, kind: input, shape index: {}]
  %s3 = inlined_call_operand.hbm [shape: f32[80,128], index: 3, kind: output, shape index: {}]
  %s4 = sld [smem:[#allocation0]]
  $region22: #{seq2seq_decoder_forward.9} parent=0
    _
  %s6 = ssub.s32 1, %s4
  %s7 = scalar_select 0, %s6, %s4
  $region1: #{seq2seq_decoder_forward.9} parent=0
    #allocation2 [shape = 'u8[40960]{0}', space=vmem, size = 0xa000, scoped, tag = 'output window, operand 0, single buffered']
    #allocation3 [shape = 's32[1]{0}', space=sflag, size = 0x4, scoped, tag = 'scoped memory for seq2seq_decoder_forward.9']
    %8 = vsyncpa [#allocation3], 0
    // Predicated region
    $region2: #{seq2seq_decoder_forward.9} parent=1 // pred_check
      _
    $region3: #{seq2seq_decoder_forward.9} parent=1 // pred_check_branch
      %10 = sbr.rel (0) target = $region5
    $region4: #{seq2seq_decoder_forward.9} parent=1 // pred_region
      _
    $region5: #{seq2seq_decoder_forward.9} parent=1 // pred_fallthru
      _
    // Predicated region
    $region6: #{seq2seq_decoder_forward.9} parent=1 // pred_check
      _
    $region7: #{seq2seq_decoder_forward.9} parent=1 // pred_check_branch
      %12 = sbr.rel (0) target = $region9
    $region8: #{seq2seq_decoder_forward.9} parent=1 // pred_region
      _
    $region9: #{seq2seq_decoder_forward.9} parent=1 // pred_fallthru
      _
    // Predicated region
    $region10: #{seq2seq_decoder_forward.9} parent=1 // pred_check
      _
    $region11: #{seq2seq_decoder_forward.9} parent=1 // pred_check_branch
      %14 = sbr.rel (0) target = $region13
    $region12: #{seq2seq_decoder_forward.9} parent=1 // pred_region
      _
    $region13: #{seq2seq_decoder_forward.9} parent=1 // pred_fallthru
      _
    %v15 = vld [vmem:[%s0] sm:$0xff]
    %v16 = vld [vmem:[%s0 + $0x8] sm:$0xff]
    %v17 = vld [vmem:[%s0 + $0x10] sm:$0xff]
    %v18 = vld [vmem:[%s0 + $0x18] sm:$0xff]
    %v19 = vld [vmem:[%s0 + $0x20] sm:$0xff]
    %v20 = vld [vmem:[%s0 + $0x28] sm:$0xff]
    %v21 = vld [vmem:[%s0 + $0x30] sm:$0xff]
    %v22 = vld [vmem:[%s0 + $0x38] sm:$0xff]
    %v23 = vld [vmem:[%s0 + $0x40] sm:$0xff]
    %v24 = vld [vmem:[%s0 + $0x48] sm:$0xff]
    %v25 = vld [vmem:[%s1] sm:$0xff]
    %v26 = vld [vmem:[%s1 + $0x8] sm:$0xff]
    %v27 = vld [vmem:[%s1 + $0x10] sm:$0xff]
    %v28 = vld [vmem:[%s1 + $0x18] sm:$0xff]
    %v29 = vld [vmem:[%s2] sm:$0x1]
    %v31 = vlaneseq
    %v32 = vshrl.u32 %v31, 7
    %v33 = vsub.s32 0, %v32
    %v34 = vrot.slane %v29, %v33
    %vm36 = vcmask 261120
    %v38 = vsel %vm36, %v15, 0
    %v41 = vsel %vm36, %v16, 0
    %v44 = vsel %vm36, %v17, 0
    %v47 = vsel %vm36, %v18, 0
    %v50 = vsel %vm36, %v19, 0
    %v53 = vsel %vm36, %v20, 0
    %v56 = vsel %vm36, %v21, 0
    %v59 = vsel %vm36, %v22, 0
    %v62 = vsel %vm36, %v23, 0
    %v65 = vsel %vm36, %v24, 0
    %67 = vmatprep.subr.mxu0 0.0
    %68 = vmatpush1.msra.mxu0 %v25
    %69 = vmatprep.subr.mxu0 0.0
    %70 = vmatpush1.msra.mxu0 %v26
    %71 = vmatprep.subr.mxu0 0.0
    %72 = vmatpush1.msra.mxu0 %v27
    %73 = vmatprep.subr.mxu0 0.0
    %74 = vmatpush1.msra.mxu0 %v28
    %75 = vmatprep.subr.mxu0 0.0
    %76 = vmatpush1.msra.mxu0 0.0
    %77 = vmatprep.subr.mxu0 0.0
    %78 = vmatpush1.msra.mxu0 0.0
    %79 = vmatprep.subr.mxu0 0.0
    %80 = vmatpush1.msra.mxu0 0.0
    %81 = vmatprep.subr.mxu0 0.0
    %82 = vmatpush1.msra.mxu0 0.0
    %83 = vmatprep.subr.mxu0 0.0
    %84 = vmatpush1.msra.mxu0 0.0
    %85 = vmatprep.subr.mxu0 0.0
    %86 = vmatpush1.msra.mxu0 0.0
    %87 = vmatprep.subr.mxu0 0.0
    %88 = vmatpush1.msra.mxu0 0.0
    %89 = vmatprep.subr.mxu0 0.0
    %90 = vmatpush1.msra.mxu0 0.0
    %91 = vmatprep.subr.mxu0 0.0
    %92 = vmatpush1.msra.mxu0 0.0
    %93 = vmatprep.subr.mxu0 0.0
    %94 = vmatpush1.msra.mxu0 0.0
    %95 = vmatprep.subr.mxu0 0.0
    %96 = vmatpush1.msra.mxu0 0.0
    %97 = vmatprep.subr.mxu0 0.0
    %98 = vmatpush1.msra.mxu0 0.0
    %99 = vmatprep.subr.mxu0 0.0
    %100 = vmatpush1.msra.mxu0 0.0
    %101 = vmatprep.subr.mxu0 0.0
    %102 = vmatpush1.msra.mxu0 0.0
    %103 = vmatprep.subr.mxu0 0.0
    %104 = vmatpush1.msra.mxu0 0.0
    %105 = vmatprep.subr.mxu0 0.0
    %106 = vmatpush1.msra.mxu0 0.0
    %107 = vmatprep.subr.mxu0 0.0
    %108 = vmatpush1.msra.mxu0 0.0
    %109 = vmatprep.subr.mxu0 0.0
    %110 = vmatpush1.msra.mxu0 0.0
    %111 = vmatprep.subr.mxu0 0.0
    %112 = vmatpush1.msra.mxu0 0.0
    %113 = vmatprep.subr.mxu0 0.0
    %114 = vmatpush1.msra.mxu0 0.0
    %115 = vmatprep.subr.mxu0 0.0
    %116 = vmatpush1.msra.mxu0 0.0
    %117 = vmatprep.subr.mxu0 0.0
    %118 = vmatpush1.msra.mxu0 0.0
    %119 = vmatprep.subr.mxu0 0.0
    %120 = vmatpush1.msra.mxu0 0.0
    %121 = vmatprep.subr.mxu0 0.0
    %122 = vmatpush1.msra.mxu0 0.0
    %123 = vmatprep.subr.mxu0 0.0
    %124 = vmatpush1.msra.mxu0 0.0
    %125 = vmatprep.subr.mxu0 0.0
    %126 = vmatpush1.msra.mxu0 0.0
    %127 = vmatprep.subr.mxu0 0.0
    %128 = vmatpush1.msra.mxu0 0.0
    %129 = vmatprep.subr.mxu0 0.0
    %130 = vmatpush1.msra.mxu0 0.0
    %131 = vmatprep.mubr.f32.mxu0 0.0
    %132 = vmatmul.mubr.f32.gmra.mrb[0].mxu0 %v38
    %v133 = vpop.f32.mrb[0].mxu0
    %v134 = vadd.f32 %v34, %v133
    %v135 = vpop.f32.mrb[0].mxu0
    %136 = vmatprep.mubr.f32.mxu0 0.0
    %137 = vmatmul.mubr.f32.gmra.mrb[0].mxu0 %v41
    %v138 = vpop.f32.mrb[0].mxu0
    %v139 = vadd.f32 %v34, %v138
    %v140 = vpop.f32.mrb[0].mxu0
    %141 = vmatprep.mubr.f32.mxu0 0.0
    %142 = vmatmul.mubr.f32.gmra.mrb[0].mxu0 %v44
    %v143 = vpop.f32.mrb[0].mxu0
    %v144 = vadd.f32 %v34, %v143
    %v145 = vpop.f32.mrb[0].mxu0
    %146 = vmatprep.mubr.f32.mxu0 0.0
    %147 = vmatmul.mubr.f32.gmra.mrb[0].mxu0 %v47
    %v148 = vpop.f32.mrb[0].mxu0
    %v149 = vadd.f32 %v34, %v148
    %v150 = vpop.f32.mrb[0].mxu0
    %151 = vmatprep.mubr.f32.mxu0 0.0
    %152 = vmatmul.mubr.f32.gmra.mrb[0].mxu0 %v50
    %v153 = vpop.f32.mrb[0].mxu0
    %v154 = vadd.f32 %v34, %v153
    %v155 = vpop.f32.mrb[0].mxu0
    %156 = vmatprep.mubr.f32.mxu0 0.0
    %157 = vmatmul.mubr.f32.gmra.mrb[0].mxu0 %v53
    %v158 = vpop.f32.mrb[0].mxu0
    %v159 = vadd.f32 %v34, %v158
    %v160 = vpop.f32.mrb[0].mxu0
    %161 = vmatprep.mubr.f32.mxu0 0.0
    %162 = vmatmul.mubr.f32.gmra.mrb[0].mxu0 %v56
    %v163 = vpop.f32.mrb[0].mxu0
    %v164 = vadd.f32 %v34, %v163
    %v165 = vpop.f32.mrb[0].mxu0
    %166 = vmatprep.mubr.f32.mxu0 0.0
    %167 = vmatmul.mubr.f32.gmra.mrb[0].mxu0 %v59
    %v168 = vpop.f32.mrb[0].mxu0
    %v169 = vadd.f32 %v34, %v168
    %v170 = vpop.f32.mrb[0].mxu0
    %171 = vmatprep.mubr.f32.mxu0 0.0
    %172 = vmatmul.mubr.f32.gmra.mrb[0].mxu0 %v62
    %v173 = vpop.f32.mrb[0].mxu0
    %v174 = vadd.f32 %v34, %v173
    %v175 = vpop.f32.mrb[0].mxu0
    %176 = vmatprep.mubr.f32.mxu0 0.0
    %177 = vmatmul.mubr.f32.gmra.mrb[0].mxu0 %v65
    %v178 = vpop.f32.mrb[0].mxu0
    %v179 = vadd.f32 %v34, %v178
    %v180 = vpop.f32.mrb[0].mxu0
    %181 = vdwg.mxu0
    %182 = vst [vmem:[#allocation2] sm:$0xff] %v134
    %183 = vst [vmem:[#allocation2 + $0x8] sm:$0xff] %v139
    %184 = vst [vmem:[#allocation2 + $0x10] sm:$0xff] %v144
    %185 = vst [vmem:[#allocation2 + $0x18] sm:$0xff] %v149
    %186 = vst [vmem:[#allocation2 + $0x20] sm:$0xff] %v154
    %187 = vst [vmem:[#allocation2 + $0x28] sm:$0xff] %v159
    %188 = vst [vmem:[#allocation2 + $0x30] sm:$0xff] %v164
    %189 = vst [vmem:[#allocation2 + $0x38] sm:$0xff] %v169
    %190 = vst [vmem:[#allocation2 + $0x40] sm:$0xff] %v174
    %191 = vst [vmem:[#allocation2 + $0x48] sm:$0xff] %v179
    // Predicated region
    $region14: #{seq2seq_decoder_forward.9} parent=1 // pred_check
      _
    $region15: #{seq2seq_decoder_forward.9} parent=1 // pred_check_branch
      %193 = sbr.rel (0) target = $region17
    $region16: #{seq2seq_decoder_forward.9} parent=1 // pred_region
      %s195 = ssub.s32 1280, 1280
      %196 = vsyncadd [#allocation3], %s195
      %s197 = sshll.u32 [#allocation2], 4
      %s198 = int_to_ptr.vmem [resolvable:$true] %s197
      %203 = dma.vmem_to_hbm [thread:$0]  %s198, 1280, %s3, [#allocation3], 128, 128, 8
    $region17: #{seq2seq_decoder_forward.9} parent=1 // pred_fallthru
      _
    // Predicated region
    $region18: #{seq2seq_decoder_forward.9} parent=1 // pred_check
      _
    $region19: #{seq2seq_decoder_forward.9} parent=1 // pred_check_branch
      %205 = sbr.rel (0) target = $region21
    $region20: #{seq2seq_decoder_forward.9} parent=1 // pred_region
      %206 = dma.done [#allocation3], 1280
    $region21: #{seq2seq_decoder_forward.9} parent=1 // pred_fallthru
      _
    %207 = vsyncpa [#allocation3], 1

</llo_original>
